<compile_context>
chip_gen: v7x
topology: tpu7x:2x2x1
jax: 0.10.0
libtpu: 0.0.40
codegen_flags: <defaults>
</compile_context>

<pallas_src>
import functools

import jax
import jax.numpy as jnp
from jax.experimental import pallas as pl
from jax.experimental.pallas import tpu as pltpu

_MXU_DTYPE = jnp.bfloat16   # MXU operand dtype; accumulation/softmax/LN stay f32.
_LN_EPS = 1e-6              # Matches the transformer SubLayers this module wraps.
                            # TODO(synk): use 1e-5 if the checkpoint used the
                            # nn.LayerNorm default eps.


def _layer_norm(x, gamma, beta, eps=_LN_EPS):
    mean = jnp.mean(x, axis=-1, keepdims=True)
    var = jnp.mean(jnp.square(x - mean), axis=-1, keepdims=True)
    return (x - mean) * jax.lax.rsqrt(var + eps) * gamma + beta


def mha_ffn_kernel(bc, lq, lk, n_head, d_k, d_v, write_attn,
                   q_ref, k_ref, v_ref,
                   w_qs_ref, w_ks_ref, w_vs_ref, w_fc_ref,
                   ln1_g_ref, ln1_b_ref,
                   w1_ref, b1_ref, w2_ref, b2_ref,
                   ln2_g_ref, ln2_b_ref,
                   *out_refs):
    """One grid step processes a chunk of `bc` batch elements.

    q_ref: (bc*lq, D) f32 rows; k_ref / v_ref: (bc*lk, D) bf16 rows
    (batch-major, flat).  Weights are resident across grid steps.
    """
    out_ref = out_refs[0]
    attn_ref = out_refs[1] if write_attn else None

    H, dk, dv = n_head, d_k, d_v
    cd = _MXU_DTYPE
    f32 = jnp.float32
    nq = bc * lq

    q2 = q_ref[...]                                   # (nq, D) f32; residual input

    # --- Q/K/V projections: one lane-dense (rows, D) @ (D, H*d) matmul per
    # tensor; heads live in the lane dim of the output.  The 1/sqrt(d_k)
    # softmax temperature was folded into w_qs by the wrapper.
    qf = jnp.dot(q2.astype(cd), w_qs_ref[...],
                 preferred_element_type=f32)          # (nq, H*dk)
    kf = jnp.dot(k_ref[...], w_ks_ref[...],
                 preferred_element_type=f32)          # (bc*lk, H*dk)
    vf = jnp.dot(v_ref[...], w_vs_ref[...],
                 preferred_element_type=f32)          # (bc*lk, H*dv)

    # Make the chunk's batch axis explicit for the (tiny) attention matmuls.
    # Minor (lane) dims are untouched -> pure row regroupings.
    q3 = qf.reshape(bc, lq, H * dk).astype(cd)
    k3 = kf.reshape(bc, lk, H * dk).astype(cd)
    v3 = vf.reshape(bc, lk, H * dv).astype(cd)

    # --- Scaled dot-product attention, batched over the whole chunk in every
    # matmul (no per-batch-element loop, no batch concatenates).  Heads are
    # static lane slices of the flat projections; H is a small compile-time
    # constant, so the unroll stays tiny and temporaries are consumed
    # immediately.
    ctx_heads = []
    attn_heads = []
    for h in range(H):
        qh = q3[:, :, h * dk:(h + 1) * dk]            # (bc, lq, dk)
        kh = k3[:, :, h * dk:(h + 1) * dk]            # (bc, lk, dk)
        vh = v3[:, :, h * dv:(h + 1) * dv]            # (bc, lk, dv)
        s = jnp.einsum('bqd,bkd->bqk', qh, kh,
                       preferred_element_type=f32)    # (bc, lq, lk) f32
        s = s - jnp.max(s, axis=-1, keepdims=True)
        e = jnp.exp(s)
        a = e / jnp.sum(e, axis=-1, keepdims=True)    # exact softmax (attn is output)
        attn_heads.append(a)
        # TODO(synk): attention dropout omitted (inference-mode identity).
        ctx_heads.append(
            jnp.einsum('bqk,bkd->bqd', a.astype(cd), vh,
                       preferred_element_type=f32))   # (bc, lq, dv)

    if write_attn:
        # Single all-heads slab store per grid step, lane width H*lk.
        attn_ref[...] = jnp.concatenate(attn_heads, axis=-1)   # (bc, lq, H*lk)

    # --- Output projection: lane-concatenate per-head contexts once, then a
    # single (nq, H*dv) @ (H*dv, D) matmul (no per-head fc + head-sum).
    ctx = jnp.concatenate(ctx_heads, axis=-1).reshape(nq, H * dv)
    x = jnp.dot(ctx.astype(cd), w_fc_ref[...],
                preferred_element_type=f32) + q2      # + residual
    # TODO(synk): fc-output dropout omitted (inference-mode identity).
    x = _layer_norm(x, ln1_g_ref[...], ln1_b_ref[...])

    # --- Position-wise feed forward (Linear -> ReLU -> Linear) + residual + LN.
    h1 = jnp.dot(x.astype(cd), w1_ref[...],
                 preferred_element_type=f32) + b1_ref[...]
    h1 = jnp.maximum(h1, 0.0)
    h2 = jnp.dot(h1.astype(cd), w2_ref[...],
                 preferred_element_type=f32) + b2_ref[...]
    # TODO(synk): FFN dropout omitted (inference-mode identity).
    x = _layer_norm(h2 + x, ln2_g_ref[...], ln2_b_ref[...])

    out_ref[...] = x                                  # one dense (nq, D) store


def _prep_params(params, d_k):
    """Cast matmul weights to bf16 (MXU operands) and fold the 1/sqrt(d_k)
    softmax temperature into w_qs; LayerNorm/bias params stay f32."""
    (w_qs, w_ks, w_vs, w_fc, ln1_g, ln1_b, w1, b1, w2, b2, ln2_g, ln2_b) = params
    cd = _MXU_DTYPE
    scale = 1.0 / (d_k ** 0.5)
    return ((w_qs * scale).astype(cd), w_ks.astype(cd), w_vs.astype(cd),
            w_fc.astype(cd), ln1_g, ln1_b,
            w1.astype(cd), b1, w2.astype(cd), b2, ln2_g, ln2_b)


def _num_tensorcores():
    """Best-effort TensorCore count of the local chip (v7x has 2); default 1."""
    try:
        info = pltpu.get_tpu_info()
    except Exception:
        return 1
    for attr in ("num_cores", "core_count", "cores_per_chip", "num_tensorcores"):
        n = getattr(info, attr, None)
        try:
            n = int(n)
        except (TypeError, ValueError):
            continue
        if n > 0:
            return n
    return 1


def _pick_grid_steps(B, Lq, Lk, D, H, d_k, d_v):
    """Number of grid steps over the batch.

    Default: ONE step with the whole batch folded in — the grid is a serial
    loop on single-TensorCore chips (v5e/v6e), each step costs ~0.35us of
    pipeline overhead, and a bigger chunk improves MXU sublane fill.  Two
    "parallel" steps are used only when the chip has >= 2 TensorCores (v7x
    megacore) AND each half-step still carries several microseconds of MXU
    work AND the chunked 2-D BlockSpecs stay (8,128)-legal.
    """
    if B < 2 or B % 2 != 0:
        return 1
    bc = B // 2
    if (bc * Lq) % 8 != 0 or (bc * Lk) % 8 != 0:
        return 1
    if _num_tensorcores() < 2:
        return 1
    flops_per_elem = 2.0 * (Lq * D * H * d_k + Lk * D * H * d_k
                            + Lk * D * H * d_v + H * Lq * Lk * (d_k + d_v)
                            + Lq * H * d_v * D + 2 * Lq * D * D)
    if bc * flops_per_elem < 2.0e8:      # < a few microseconds of MXU work/step
        return 1
    return 2


def my_multi_head_attention(q, k, v, params, *, n_head, d_k, d_v,
                            return_attn=True):
    """JAX wrapper reproducing MyMultiHeadAttention.forward
    (need_mask=False, is_regu=False, inference-mode dropout).

    Pass return_attn=False when the attention map is not consumed: it removes
    an entire output DMA / store path from the kernel.
    """
    squeeze_out = (q.ndim == 2)
    if squeeze_out:
        q = q[:, None, :]                     # unsqueeze(1)
    B, Lq, D = q.shape
    Lk = k.shape[1]

    n_steps = _pick_grid_steps(B, Lq, Lk, D, n_head, d_k, d_v)
    bc = B // n_steps

    # Flat row-major 2-D views so every in-kernel matmul sees lane-dense
    # (rows, features) operands and the encoder store is a single dense slab.
    # K/V feed only matmuls -> ship them as bf16 (halves their DMA bytes);
    # Q stays f32 (residual + LayerNorm path).
    # NOTE: with production d_model a multiple of 128 the stores become fully
    # unmasked lane-dense vst's; at D=32 they are as dense as the shape allows.
    q_flat = q.reshape(B * Lq, D)
    k_flat = k.reshape(B * Lk, D).astype(_MXU_DTYPE)
    v_flat = v.reshape(B * Lk, D).astype(_MXU_DTYPE)

    prepped = _prep_params(params, d_k)
    kernel = functools.partial(mha_ffn_kernel, bc, Lq, Lk, n_head, d_k, d_v,
                               return_attn)

    def const(shape):
        # Constant block index -> weights stay resident, never re-DMA'd across
        # grid steps.  (At larger d_model, pipeline_mode=pl.Buffered(1) on
        # these specs would avoid double-buffering the resident weights on
        # v7x's smaller VMEM; irrelevant at these sizes.)
        return pl.BlockSpec(shape, lambda i, n=len(shape): (0,) * n)

    in_specs = [
        pl.BlockSpec((bc * Lq, D), lambda i: (i, 0)),        # q rows
        pl.BlockSpec((bc * Lk, D), lambda i: (i, 0)),        # k rows
        pl.BlockSpec((bc * Lk, D), lambda i: (i, 0)),        # v rows
    ] + [const(p.shape) for p in prepped]                    # resident weights

    out_specs = [pl.BlockSpec((bc * Lq, D), lambda i: (i, 0))]
    out_shape = [jax.ShapeDtypeStruct((B * Lq, D), jnp.float32)]
    if return_attn:
        out_specs.append(
            pl.BlockSpec((bc, Lq, n_head * Lk), lambda i: (i, 0, 0)))
        out_shape.append(
            jax.ShapeDtypeStruct((B, Lq, n_head * Lk), jnp.float32))

    outs = pl.pallas_call(
        kernel,
        grid=(n_steps,),
        in_specs=in_specs,
        out_specs=out_specs,
        out_shape=out_shape,
        compiler_params=pltpu.CompilerParams(
            dimension_semantics=("parallel",)),
    )(q_flat, k_flat, v_flat, *prepped)

    enc = outs[0].reshape(B, Lq, D)
    if squeeze_out:
        enc = enc[:, 0, :]                    # squeeze(1)
    if return_attn:
        attn = outs[1].reshape(B, Lq, n_head, Lk).transpose(0, 2, 1, 3)
        return enc, attn
    return enc, None


def _reference(q, k, v, params, *, n_head, d_k, d_v):
    """Pure-JAX f32 reference of the same forward pass (for sanity check)."""
    (w_qs, w_ks, w_vs, w_fc, ln1_g, ln1_b, w1, b1, w2, b2, ln2_g, ln2_b) = params
    squeeze_out = (q.ndim == 2)
    if squeeze_out:
        q = q[:, None, :]
    B, Lq, D = q.shape
    Lk = k.shape[1]
    residual = q
    qp = (q @ w_qs).reshape(B, Lq, n_head, d_k).transpose(0, 2, 1, 3)
    kp = (k @ w_ks).reshape(B, Lk, n_head, d_k).transpose(0, 2, 1, 3)
    vp = (v @ w_vs).reshape(B, Lk, n_head, d_v).transpose(0, 2, 1, 3)
    scores = jnp.einsum("bhqd,bhkd->bhqk", qp / (d_k ** 0.5), kp)
    attn = jax.nn.softmax(scores, axis=-1)
    o = jnp.einsum("bhqk,bhkd->bhqd", attn, vp)
    o = o.transpose(0, 2, 1, 3).reshape(B, Lq, n_head * d_v)
    x = o @ w_fc + residual
    x = _layer_norm(x, ln1_g[0], ln1_b[0])
    res2 = x
    h = jnp.maximum(x @ w1 + b1[0], 0.0)
    x = h @ w2 + b2[0] + res2
    x = _layer_norm(x, ln2_g[0], ln2_b[0])
    if squeeze_out:
        x = x[:, 0, :]
    return x, attn


if __name__ == "__main__":
    n_head, d_model, d_kv = 4, 32, 16
    B, Lk = 2, 8

    key = jax.random.PRNGKey(0)
    keys = jax.random.split(key, 12)

    def rnd(kk, shape, scale=0.05):
        return (jax.random.normal(kk, shape) * scale).astype(jnp.float32)

    # 2D query (the module unsqueezes it to seq-len 1), 3D keys/values.
    q = rnd(keys[0], (B, d_model), 1.0)
    k_in = rnd(keys[1], (B, Lk, d_model), 1.0)
    v_in = rnd(keys[2], (B, Lk, d_model), 1.0)

    # Deterministic synthetic parameters (Linear weights stored as [in, out];
    # 1D params reshaped to (1, D) for TPU-friendly 2D refs).
    params = (
        rnd(keys[3], (d_model, n_head * d_kv)),          # w_qs
        rnd(keys[4], (d_model, n_head * d_kv)),          # w_ks
        rnd(keys[5], (d_model, n_head * d_kv)),          # w_vs
        rnd(keys[6], (n_head * d_kv, d_model)),          # fc
        jnp.ones((1, d_model), jnp.float32),             # ln1 gamma
        jnp.zeros((1, d_model), jnp.float32),            # ln1 beta
        rnd(keys[7], (d_model, d_model)),                # ffn w1
        rnd(keys[8], (1, d_model)),                      # ffn b1
        rnd(keys[9], (d_model, d_model)),                # ffn w2
        rnd(keys[10], (1, d_model)),                     # ffn b2
        jnp.ones((1, d_model), jnp.float32),             # ln2 gamma
        jnp.zeros((1, d_model), jnp.float32),            # ln2 beta
    )

    enc, attn = my_multi_head_attention(q, k_in, v_in, params,
                                        n_head=n_head, d_k=d_kv, d_v=d_kv)
    jax.block_until_ready((enc, attn))

    enc_ref, attn_map_ref = _reference(q, k_in, v_in, params,
                                       n_head=n_head, d_k=d_kv, d_v=d_kv)
    assert enc.shape == (B, d_model) and attn.shape == (B, n_head, 1, Lk)
    assert jnp.allclose(enc, enc_ref, atol=5e-2, rtol=5e-2)
    assert jnp.allclose(attn, attn_map_ref, atol=5e-2, rtol=5e-2)

    print("KERNEL_OK")
</pallas_src>

<mosaic_0001>
module attributes {stable_mosaic.version = 11 : i64} {
  func.func @mha_ffn_kernel(%arg0: i32, %arg1: memref<2x32xf32, #tpu.memory_space<vmem>>, %arg2: memref<16x32xbf16, #tpu.memory_space<vmem>>, %arg3: memref<16x32xbf16, #tpu.memory_space<vmem>>, %arg4: memref<32x64xbf16, #tpu.memory_space<vmem>>, %arg5: memref<32x64xbf16, #tpu.memory_space<vmem>>, %arg6: memref<32x64xbf16, #tpu.memory_space<vmem>>, %arg7: memref<64x32xbf16, #tpu.memory_space<vmem>>, %arg8: memref<1x32xf32, #tpu.memory_space<vmem>>, %arg9: memref<1x32xf32, #tpu.memory_space<vmem>>, %arg10: memref<32x32xbf16, #tpu.memory_space<vmem>>, %arg11: memref<1x32xf32, #tpu.memory_space<vmem>>, %arg12: memref<32x32xbf16, #tpu.memory_space<vmem>>, %arg13: memref<1x32xf32, #tpu.memory_space<vmem>>, %arg14: memref<1x32xf32, #tpu.memory_space<vmem>>, %arg15: memref<1x32xf32, #tpu.memory_space<vmem>>, %arg16: memref<2x32xf32, #tpu.memory_space<vmem>>, %arg17: memref<2x1x32xf32, #tpu.memory_space<vmem>>) attributes {dimension_semantics = [#tpu.dimension_semantics<parallel>], iteration_bounds = array<i64: 1>, scalar_prefetch = 0 : i64, scratch_operands = 0 : i64, tpu.core_type = #tpu.core_type<tc>, window_params = [{transform_indices = @transform_0, window_bounds = array<i64: 2, 32>}, {transform_indices = @transform_1, window_bounds = array<i64: 16, 32>}, {transform_indices = @transform_2, window_bounds = array<i64: 16, 32>}, {pipeline_mode = #tpu.pipeline_mode<synchronous>, transform_indices = @transform_3, window_bounds = array<i64: 32, 64>}, {pipeline_mode = #tpu.pipeline_mode<synchronous>, transform_indices = @transform_4, window_bounds = array<i64: 32, 64>}, {pipeline_mode = #tpu.pipeline_mode<synchronous>, transform_indices = @transform_5, window_bounds = array<i64: 32, 64>}, {pipeline_mode = #tpu.pipeline_mode<synchronous>, transform_indices = @transform_6, window_bounds = array<i64: 64, 32>}, {pipeline_mode = #tpu.pipeline_mode<synchronous>, transform_indices = @transform_7, window_bounds = array<i64: 1, 32>}, {pipeline_mode = #tpu.pipeline_mode<synchronous>, transform_indices = @transform_8, window_bounds = array<i64: 1, 32>}, {pipeline_mode = #tpu.pipeline_mode<synchronous>, transform_indices = @transform_9, window_bounds = array<i64: 32, 32>}, {pipeline_mode = #tpu.pipeline_mode<synchronous>, transform_indices = @transform_10, window_bounds = array<i64: 1, 32>}, {pipeline_mode = #tpu.pipeline_mode<synchronous>, transform_indices = @transform_11, window_bounds = array<i64: 32, 32>}, {pipeline_mode = #tpu.pipeline_mode<synchronous>, transform_indices = @transform_12, window_bounds = array<i64: 1, 32>}, {pipeline_mode = #tpu.pipeline_mode<synchronous>, transform_indices = @transform_13, window_bounds = array<i64: 1, 32>}, {pipeline_mode = #tpu.pipeline_mode<synchronous>, transform_indices = @transform_14, window_bounds = array<i64: 1, 32>}, {transform_indices = @transform_15, window_bounds = array<i64: 2, 32>}, {transform_indices = @transform_16, window_bounds = array<i64: 2, 1, 32>}]} {
    %c0 = arith.constant 0 : index
    %c0_0 = arith.constant 0 : index
    %0 = vector.load %arg1[%c0, %c0_0] : memref<2x32xf32, #tpu.memory_space<vmem>>, vector<2x32xf32>
    %1 = arith.truncf %0 : vector<2x32xf32> to vector<2x32xbf16>
    %c0_1 = arith.constant 0 : index
    %c0_2 = arith.constant 0 : index
    %2 = vector.load %arg4[%c0_1, %c0_2] : memref<32x64xbf16, #tpu.memory_space<vmem>>, vector<32x64xbf16>
    %cst = arith.constant dense<0.000000e+00> : vector<2x64xf32>
    %3 = tpu.matmul %1, %2, %cst {dimension_numbers = #tpu.dot_dimension_numbers<[1], [0], [0], [1], [0, 0, 1, 1], [], []>} : vector<2x32xbf16>, vector<32x64xbf16>, vector<2x64xf32> -> vector<2x64xf32>
    %c0_3 = arith.constant 0 : index
    %c0_4 = arith.constant 0 : index
    %4 = vector.load %arg2[%c0_3, %c0_4] : memref<16x32xbf16, #tpu.memory_space<vmem>>, vector<16x32xbf16>
    %c0_5 = arith.constant 0 : index
    %c0_6 = arith.constant 0 : index
    %5 = vector.load %arg5[%c0_5, %c0_6] : memref<32x64xbf16, #tpu.memory_space<vmem>>, vector<32x64xbf16>
    %cst_7 = arith.constant dense<0.000000e+00> : vector<16x64xf32>
    %6 = tpu.matmul %4, %5, %cst_7 {dimension_numbers = #tpu.dot_dimension_numbers<[1], [0], [0], [1], [0, 0, 1, 1], [], []>} : vector<16x32xbf16>, vector<32x64xbf16>, vector<16x64xf32> -> vector<16x64xf32>
    %c0_8 = arith.constant 0 : index
    %c0_9 = arith.constant 0 : index
    %7 = vector.load %arg3[%c0_8, %c0_9] : memref<16x32xbf16, #tpu.memory_space<vmem>>, vector<16x32xbf16>
    %c0_10 = arith.constant 0 : index
    %c0_11 = arith.constant 0 : index
    %8 = vector.load %arg6[%c0_10, %c0_11] : memref<32x64xbf16, #tpu.memory_space<vmem>>, vector<32x64xbf16>
    %cst_12 = arith.constant dense<0.000000e+00> : vector<16x64xf32>
    %9 = tpu.matmul %7, %8, %cst_12 {dimension_numbers = #tpu.dot_dimension_numbers<[1], [0], [0], [1], [0, 0, 1, 1], [], []>} : vector<16x32xbf16>, vector<32x64xbf16>, vector<16x64xf32> -> vector<16x64xf32>
    %10 = vector.shape_cast %3 : vector<2x64xf32> to vector<2x1x64xf32>
    %11 = arith.truncf %10 : vector<2x1x64xf32> to vector<2x1x64xbf16>
    %12 = vector.shape_cast %6 : vector<16x64xf32> to vector<2x8x64xf32>
    %13 = arith.truncf %12 : vector<2x8x64xf32> to vector<2x8x64xbf16>
    %14 = vector.shape_cast %9 : vector<16x64xf32> to vector<2x8x64xf32>
    %15 = arith.truncf %14 : vector<2x8x64xf32> to vector<2x8x64xbf16>
    %16 = vector.extract_strided_slice %11 {offsets = [0, 0, 0], sizes = [2, 1, 16], strides = [1, 1, 1]} : vector<2x1x64xbf16> to vector<2x1x16xbf16>
    %17 = vector.extract_strided_slice %13 {offsets = [0, 0, 0], sizes = [2, 8, 16], strides = [1, 1, 1]} : vector<2x8x64xbf16> to vector<2x8x16xbf16>
    %18 = vector.extract_strided_slice %15 {offsets = [0, 0, 0], sizes = [2, 8, 16], strides = [1, 1, 1]} : vector<2x8x64xbf16> to vector<2x8x16xbf16>
    "tpu.trace_start"() <{level = 10 : i32, message = "bqd,bkd->bqk"}> : () -> ()
    %cst_13 = arith.constant dense<0.000000e+00> : vector<2x1x8xf32>
    %19 = tpu.matmul %16, %17, %cst_13 {dimension_numbers = #tpu.dot_dimension_numbers<[2], [2], [1], [1], [0, 0, 0, 1, 1, 1], [0], [0]>} : vector<2x1x16xbf16>, vector<2x8x16xbf16>, vector<2x1x8xf32> -> vector<2x1x8xf32>
    "tpu.trace_stop"() : () -> ()
    %cst_14 = arith.constant dense<0xFF800000> : vector<2x1xf32>
    %20 = vector.multi_reduction <maximumf>, %19, %cst_14 [2] : vector<2x1x8xf32> to vector<2x1xf32>
    %21 = vector.shape_cast %20 : vector<2x1xf32> to vector<2x1x1xf32>
    %22 = vector.broadcast %21 : vector<2x1x1xf32> to vector<2x1x8xf32>
    %23 = arith.subf %19, %22 : vector<2x1x8xf32>
    %24 = math.exp %23 : vector<2x1x8xf32>
    %cst_15 = arith.constant dense<0.000000e+00> : vector<2x1xf32>
    %25 = vector.multi_reduction <add>, %24, %cst_15 [2] : vector<2x1x8xf32> to vector<2x1xf32>
    %26 = vector.shape_cast %25 : vector<2x1xf32> to vector<2x1x1xf32>
    %27 = vector.broadcast %26 : vector<2x1x1xf32> to vector<2x1x8xf32>
    %28 = arith.divf %24, %27 : vector<2x1x8xf32>
    %29 = arith.truncf %28 : vector<2x1x8xf32> to vector<2x1x8xbf16>
    "tpu.trace_start"() <{level = 10 : i32, message = "bqk,bkd->bqd"}> : () -> ()
    %cst_16 = arith.constant dense<0.000000e+00> : vector<2x1x16xf32>
    %30 = tpu.matmul %29, %18, %cst_16 {dimension_numbers = #tpu.dot_dimension_numbers<[2], [1], [1], [2], [0, 0, 0, 1, 1, 2], [0], [0]>} : vector<2x1x8xbf16>, vector<2x8x16xbf16>, vector<2x1x16xf32> -> vector<2x1x16xf32>
    "tpu.trace_stop"() : () -> ()
    %31 = vector.extract_strided_slice %11 {offsets = [0, 0, 16], sizes = [2, 1, 16], strides = [1, 1, 1]} : vector<2x1x64xbf16> to vector<2x1x16xbf16>
    %32 = vector.extract_strided_slice %13 {offsets = [0, 0, 16], sizes = [2, 8, 16], strides = [1, 1, 1]} : vector<2x8x64xbf16> to vector<2x8x16xbf16>
    %33 = vector.extract_strided_slice %15 {offsets = [0, 0, 16], sizes = [2, 8, 16], strides = [1, 1, 1]} : vector<2x8x64xbf16> to vector<2x8x16xbf16>
    "tpu.trace_start"() <{level = 10 : i32, message = "bqd,bkd->bqk"}> : () -> ()
    %cst_17 = arith.constant dense<0.000000e+00> : vector<2x1x8xf32>
    %34 = tpu.matmul %31, %32, %cst_17 {dimension_numbers = #tpu.dot_dimension_numbers<[2], [2], [1], [1], [0, 0, 0, 1, 1, 1], [0], [0]>} : vector<2x1x16xbf16>, vector<2x8x16xbf16>, vector<2x1x8xf32> -> vector<2x1x8xf32>
    "tpu.trace_stop"() : () -> ()
    %cst_18 = arith.constant dense<0xFF800000> : vector<2x1xf32>
    %35 = vector.multi_reduction <maximumf>, %34, %cst_18 [2] : vector<2x1x8xf32> to vector<2x1xf32>
    %36 = vector.shape_cast %35 : vector<2x1xf32> to vector<2x1x1xf32>
    %37 = vector.broadcast %36 : vector<2x1x1xf32> to vector<2x1x8xf32>
    %38 = arith.subf %34, %37 : vector<2x1x8xf32>
    %39 = math.exp %38 : vector<2x1x8xf32>
    %cst_19 = arith.constant dense<0.000000e+00> : vector<2x1xf32>
    %40 = vector.multi_reduction <add>, %39, %cst_19 [2] : vector<2x1x8xf32> to vector<2x1xf32>
    %41 = vector.shape_cast %40 : vector<2x1xf32> to vector<2x1x1xf32>
    %42 = vector.broadcast %41 : vector<2x1x1xf32> to vector<2x1x8xf32>
    %43 = arith.divf %39, %42 : vector<2x1x8xf32>
    %44 = arith.truncf %43 : vector<2x1x8xf32> to vector<2x1x8xbf16>
    "tpu.trace_start"() <{level = 10 : i32, message = "bqk,bkd->bqd"}> : () -> ()
    %cst_20 = arith.constant dense<0.000000e+00> : vector<2x1x16xf32>
    %45 = tpu.matmul %44, %33, %cst_20 {dimension_numbers = #tpu.dot_dimension_numbers<[2], [1], [1], [2], [0, 0, 0, 1, 1, 2], [0], [0]>} : vector<2x1x8xbf16>, vector<2x8x16xbf16>, vector<2x1x16xf32> -> vector<2x1x16xf32>
    "tpu.trace_stop"() : () -> ()
    %46 = vector.extract_strided_slice %11 {offsets = [0, 0, 32], sizes = [2, 1, 16], strides = [1, 1, 1]} : vector<2x1x64xbf16> to vector<2x1x16xbf16>
    %47 = vector.extract_strided_slice %13 {offsets = [0, 0, 32], sizes = [2, 8, 16], strides = [1, 1, 1]} : vector<2x8x64xbf16> to vector<2x8x16xbf16>
    %48 = vector.extract_strided_slice %15 {offsets = [0, 0, 32], sizes = [2, 8, 16], strides = [1, 1, 1]} : vector<2x8x64xbf16> to vector<2x8x16xbf16>
    "tpu.trace_start"() <{level = 10 : i32, message = "bqd,bkd->bqk"}> : () -> ()
    %cst_21 = arith.constant dense<0.000000e+00> : vector<2x1x8xf32>
    %49 = tpu.matmul %46, %47, %cst_21 {dimension_numbers = #tpu.dot_dimension_numbers<[2], [2], [1], [1], [0, 0, 0, 1, 1, 1], [0], [0]>} : vector<2x1x16xbf16>, vector<2x8x16xbf16>, vector<2x1x8xf32> -> vector<2x1x8xf32>
    "tpu.trace_stop"() : () -> ()
    %cst_22 = arith.constant dense<0xFF800000> : vector<2x1xf32>
    %50 = vector.multi_reduction <maximumf>, %49, %cst_22 [2] : vector<2x1x8xf32> to vector<2x1xf32>
    %51 = vector.shape_cast %50 : vector<2x1xf32> to vector<2x1x1xf32>
    %52 = vector.broadcast %51 : vector<2x1x1xf32> to vector<2x1x8xf32>
    %53 = arith.subf %49, %52 : vector<2x1x8xf32>
    %54 = math.exp %53 : vector<2x1x8xf32>
    %cst_23 = arith.constant dense<0.000000e+00> : vector<2x1xf32>
    %55 = vector.multi_reduction <add>, %54, %cst_23 [2] : vector<2x1x8xf32> to vector<2x1xf32>
    %56 = vector.shape_cast %55 : vector<2x1xf32> to vector<2x1x1xf32>
    %57 = vector.broadcast %56 : vector<2x1x1xf32> to vector<2x1x8xf32>
    %58 = arith.divf %54, %57 : vector<2x1x8xf32>
    %59 = arith.truncf %58 : vector<2x1x8xf32> to vector<2x1x8xbf16>
    "tpu.trace_start"() <{level = 10 : i32, message = "bqk,bkd->bqd"}> : () -> ()
    %cst_24 = arith.constant dense<0.000000e+00> : vector<2x1x16xf32>
    %60 = tpu.matmul %59, %48, %cst_24 {dimension_numbers = #tpu.dot_dimension_numbers<[2], [1], [1], [2], [0, 0, 0, 1, 1, 2], [0], [0]>} : vector<2x1x8xbf16>, vector<2x8x16xbf16>, vector<2x1x16xf32> -> vector<2x1x16xf32>
    "tpu.trace_stop"() : () -> ()
    %61 = vector.extract_strided_slice %11 {offsets = [0, 0, 48], sizes = [2, 1, 16], strides = [1, 1, 1]} : vector<2x1x64xbf16> to vector<2x1x16xbf16>
    %62 = vector.extract_strided_slice %13 {offsets = [0, 0, 48], sizes = [2, 8, 16], strides = [1, 1, 1]} : vector<2x8x64xbf16> to vector<2x8x16xbf16>
    %63 = vector.extract_strided_slice %15 {offsets = [0, 0, 48], sizes = [2, 8, 16], strides = [1, 1, 1]} : vector<2x8x64xbf16> to vector<2x8x16xbf16>
    "tpu.trace_start"() <{level = 10 : i32, message = "bqd,bkd->bqk"}> : () -> ()
    %cst_25 = arith.constant dense<0.000000e+00> : vector<2x1x8xf32>
    %64 = tpu.matmul %61, %62, %cst_25 {dimension_numbers = #tpu.dot_dimension_numbers<[2], [2], [1], [1], [0, 0, 0, 1, 1, 1], [0], [0]>} : vector<2x1x16xbf16>, vector<2x8x16xbf16>, vector<2x1x8xf32> -> vector<2x1x8xf32>
    "tpu.trace_stop"() : () -> ()
    %cst_26 = arith.constant dense<0xFF800000> : vector<2x1xf32>
    %65 = vector.multi_reduction <maximumf>, %64, %cst_26 [2] : vector<2x1x8xf32> to vector<2x1xf32>
    %66 = vector.shape_cast %65 : vector<2x1xf32> to vector<2x1x1xf32>
    %67 = vector.broadcast %66 : vector<2x1x1xf32> to vector<2x1x8xf32>
    %68 = arith.subf %64, %67 : vector<2x1x8xf32>
    %69 = math.exp %68 : vector<2x1x8xf32>
    %cst_27 = arith.constant dense<0.000000e+00> : vector<2x1xf32>
    %70 = vector.multi_reduction <add>, %69, %cst_27 [2] : vector<2x1x8xf32> to vector<2x1xf32>
    %71 = vector.shape_cast %70 : vector<2x1xf32> to vector<2x1x1xf32>
    %72 = vector.broadcast %71 : vector<2x1x1xf32> to vector<2x1x8xf32>
    %73 = arith.divf %69, %72 : vector<2x1x8xf32>
    %74 = arith.truncf %73 : vector<2x1x8xf32> to vector<2x1x8xbf16>
    "tpu.trace_start"() <{level = 10 : i32, message = "bqk,bkd->bqd"}> : () -> ()
    %cst_28 = arith.constant dense<0.000000e+00> : vector<2x1x16xf32>
    %75 = tpu.matmul %74, %63, %cst_28 {dimension_numbers = #tpu.dot_dimension_numbers<[2], [1], [1], [2], [0, 0, 0, 1, 1, 2], [0], [0]>} : vector<2x1x8xbf16>, vector<2x8x16xbf16>, vector<2x1x16xf32> -> vector<2x1x16xf32>
    "tpu.trace_stop"() : () -> ()
    %76 = tpu.concatenate %28, %43, %58, %73 in 2 : vector<2x1x8xf32>, vector<2x1x8xf32>, vector<2x1x8xf32>, vector<2x1x8xf32> -> vector<2x1x32xf32>
    %c0_29 = arith.constant 0 : index
    %c0_30 = arith.constant 0 : index
    %c0_31 = arith.constant 0 : index
    %77 = vector.load %arg17[%c0_29, %c0_30, %c0_31] : memref<2x1x32xf32, #tpu.memory_space<vmem>>, vector<2x1x32xf32>
    tpu.vector_store %arg17[%c0_29, %c0_30, %c0_31], %76 {strides = array<i32>} : memref<2x1x32xf32, #tpu.memory_space<vmem>>, vector<2x1x32xf32>,
    %78 = tpu.concatenate %30, %45, %60, %75 in 2 : vector<2x1x16xf32>, vector<2x1x16xf32>, vector<2x1x16xf32>, vector<2x1x16xf32> -> vector<2x1x64xf32>
    %79 = vector.shape_cast %78 : vector<2x1x64xf32> to vector<2x64xf32>
    %80 = arith.truncf %79 : vector<2x64xf32> to vector<2x64xbf16>
    %c0_32 = arith.constant 0 : index
    %c0_33 = arith.constant 0 : index
    %81 = vector.load %arg7[%c0_32, %c0_33] : memref<64x32xbf16, #tpu.memory_space<vmem>>, vector<64x32xbf16>
    %cst_34 = arith.constant dense<0.000000e+00> : vector<2x32xf32>
    %82 = tpu.matmul %80, %81, %cst_34 {dimension_numbers = #tpu.dot_dimension_numbers<[1], [0], [0], [1], [0, 0, 1, 1], [], []>} : vector<2x64xbf16>, vector<64x32xbf16>, vector<2x32xf32> -> vector<2x32xf32>
    %83 = arith.addf %82, %0 : vector<2x32xf32>
    %c0_35 = arith.constant 0 : index
    %c0_36 = arith.constant 0 : index
    %84 = vector.load %arg8[%c0_35, %c0_36] : memref<1x32xf32, #tpu.memory_space<vmem>>, vector<1x32xf32>
    %c0_37 = arith.constant 0 : index
    %c0_38 = arith.constant 0 : index
    %85 = vector.load %arg9[%c0_37, %c0_38] : memref<1x32xf32, #tpu.memory_space<vmem>>, vector<1x32xf32>
    %cst_39 = arith.constant dense<0.000000e+00> : vector<2xf32>
    %86 = vector.multi_reduction <add>, %83, %cst_39 [1] : vector<2x32xf32> to vector<2xf32>
    %87 = vector.shape_cast %86 : vector<2xf32> to vector<2x1xf32>
    %cst_40 = arith.constant 3.200000e+01 : f32
    %88 = vector.broadcast %cst_40 : f32 to vector<2x1xf32>
    %89 = arith.divf %87, %88 : vector<2x1xf32>
    %90 = vector.broadcast %89 : vector<2x1xf32> to vector<2x32xf32>
    %91 = arith.subf %83, %90 : vector<2x32xf32>
    %92 = arith.mulf %91, %91 : vector<2x32xf32>
    %cst_41 = arith.constant dense<0.000000e+00> : vector<2xf32>
    %93 = vector.multi_reduction <add>, %92, %cst_41 [1] : vector<2x32xf32> to vector<2xf32>
    %94 = vector.shape_cast %93 : vector<2xf32> to vector<2x1xf32>
    %cst_42 = arith.constant 3.200000e+01 : f32
    %95 = vector.broadcast %cst_42 : f32 to vector<2x1xf32>
    %96 = arith.divf %94, %95 : vector<2x1xf32>
    %97 = vector.broadcast %89 : vector<2x1xf32> to vector<2x32xf32>
    %98 = arith.subf %83, %97 : vector<2x32xf32>
    %cst_43 = arith.constant 9.99999997E-7 : f32
    %99 = vector.broadcast %cst_43 : f32 to vector<2x1xf32>
    %100 = arith.addf %96, %99 : vector<2x1xf32>
    %101 = math.rsqrt %100 : vector<2x1xf32>
    %102 = vector.broadcast %101 : vector<2x1xf32> to vector<2x32xf32>
    %103 = arith.mulf %98, %102 : vector<2x32xf32>
    %104 = vector.broadcast %84 : vector<1x32xf32> to vector<2x32xf32>
    %105 = arith.mulf %103, %104 : vector<2x32xf32>
    %106 = vector.broadcast %85 : vector<1x32xf32> to vector<2x32xf32>
    %107 = arith.addf %105, %106 : vector<2x32xf32>
    %108 = arith.truncf %107 : vector<2x32xf32> to vector<2x32xbf16>
    %c0_44 = arith.constant 0 : index
    %c0_45 = arith.constant 0 : index
    %109 = vector.load %arg10[%c0_44, %c0_45] : memref<32x32xbf16, #tpu.memory_space<vmem>>, vector<32x32xbf16>
    %cst_46 = arith.constant dense<0.000000e+00> : vector<2x32xf32>
    %110 = tpu.matmul %108, %109, %cst_46 {dimension_numbers = #tpu.dot_dimension_numbers<[1], [0], [0], [1], [0, 0, 1, 1], [], []>} : vector<2x32xbf16>, vector<32x32xbf16>, vector<2x32xf32> -> vector<2x32xf32>
    %c0_47 = arith.constant 0 : index
    %c0_48 = arith.constant 0 : index
    %111 = vector.load %arg11[%c0_47, %c0_48] : memref<1x32xf32, #tpu.memory_space<vmem>>, vector<1x32xf32>
    %112 = vector.broadcast %111 : vector<1x32xf32> to vector<2x32xf32>
    %113 = arith.addf %110, %112 : vector<2x32xf32>
    %cst_49 = arith.constant 0.000000e+00 : f32
    %114 = vector.broadcast %cst_49 : f32 to vector<2x32xf32>
    %115 = arith.maximumf %113, %114 : vector<2x32xf32>
    %116 = arith.truncf %115 : vector<2x32xf32> to vector<2x32xbf16>
    %c0_50 = arith.constant 0 : index
    %c0_51 = arith.constant 0 : index
    %117 = vector.load %arg12[%c0_50, %c0_51] : memref<32x32xbf16, #tpu.memory_space<vmem>>, vector<32x32xbf16>
    %cst_52 = arith.constant dense<0.000000e+00> : vector<2x32xf32>
    %118 = tpu.matmul %116, %117, %cst_52 {dimension_numbers = #tpu.dot_dimension_numbers<[1], [0], [0], [1], [0, 0, 1, 1], [], []>} : vector<2x32xbf16>, vector<32x32xbf16>, vector<2x32xf32> -> vector<2x32xf32>
    %c0_53 = arith.constant 0 : index
    %c0_54 = arith.constant 0 : index
    %119 = vector.load %arg13[%c0_53, %c0_54] : memref<1x32xf32, #tpu.memory_space<vmem>>, vector<1x32xf32>
    %120 = vector.broadcast %119 : vector<1x32xf32> to vector<2x32xf32>
    %121 = arith.addf %118, %120 : vector<2x32xf32>
    %122 = arith.addf %121, %107 : vector<2x32xf32>
    %c0_55 = arith.constant 0 : index
    %c0_56 = arith.constant 0 : index
    %123 = vector.load %arg14[%c0_55, %c0_56] : memref<1x32xf32, #tpu.memory_space<vmem>>, vector<1x32xf32>
    %c0_57 = arith.constant 0 : index
    %c0_58 = arith.constant 0 : index
    %124 = vector.load %arg15[%c0_57, %c0_58] : memref<1x32xf32, #tpu.memory_space<vmem>>, vector<1x32xf32>
    %cst_59 = arith.constant dense<0.000000e+00> : vector<2xf32>
    %125 = vector.multi_reduction <add>, %122, %cst_59 [1] : vector<2x32xf32> to vector<2xf32>
    %126 = vector.shape_cast %125 : vector<2xf32> to vector<2x1xf32>
    %cst_60 = arith.constant 3.200000e+01 : f32
    %127 = vector.broadcast %cst_60 : f32 to vector<2x1xf32>
    %128 = arith.divf %126, %127 : vector<2x1xf32>
    %129 = vector.broadcast %128 : vector<2x1xf32> to vector<2x32xf32>
    %130 = arith.subf %122, %129 : vector<2x32xf32>
    %131 = arith.mulf %130, %130 : vector<2x32xf32>
    %cst_61 = arith.constant dense<0.000000e+00> : vector<2xf32>
    %132 = vector.multi_reduction <add>, %131, %cst_61 [1] : vector<2x32xf32> to vector<2xf32>
    %133 = vector.shape_cast %132 : vector<2xf32> to vector<2x1xf32>
    %cst_62 = arith.constant 3.200000e+01 : f32
    %134 = vector.broadcast %cst_62 : f32 to vector<2x1xf32>
    %135 = arith.divf %133, %134 : vector<2x1xf32>
    %136 = vector.broadcast %128 : vector<2x1xf32> to vector<2x32xf32>
    %137 = arith.subf %122, %136 : vector<2x32xf32>
    %cst_63 = arith.constant 9.99999997E-7 : f32
    %138 = vector.broadcast %cst_63 : f32 to vector<2x1xf32>
    %139 = arith.addf %135, %138 : vector<2x1xf32>
    %140 = math.rsqrt %139 : vector<2x1xf32>
    %141 = vector.broadcast %140 : vector<2x1xf32> to vector<2x32xf32>
    %142 = arith.mulf %137, %141 : vector<2x32xf32>
    %143 = vector.broadcast %123 : vector<1x32xf32> to vector<2x32xf32>
    %144 = arith.mulf %142, %143 : vector<2x32xf32>
    %145 = vector.broadcast %124 : vector<1x32xf32> to vector<2x32xf32>
    %146 = arith.addf %144, %145 : vector<2x32xf32>
    %c0_64 = arith.constant 0 : index
    %c0_65 = arith.constant 0 : index
    %147 = vector.load %arg16[%c0_64, %c0_65] : memref<2x32xf32, #tpu.memory_space<vmem>>, vector<2x32xf32>
    tpu.vector_store %arg16[%c0_64, %c0_65], %146 {strides = array<i32>} : memref<2x32xf32, #tpu.memory_space<vmem>>, vector<2x32xf32>,
    return
  }
  func.func @transform_0(%arg0: i32) -> (i32, i32) {
    %c0_i32 = arith.constant 0 : i32
    %c0_i32_0 = arith.constant 0 : i32
    return %arg0, %c0_i32 : i32, i32
  }
  func.func @transform_1(%arg0: i32) -> (i32, i32) {
    %c0_i32 = arith.constant 0 : i32
    %c0_i32_0 = arith.constant 0 : i32
    return %arg0, %c0_i32 : i32, i32
  }
  func.func @transform_2(%arg0: i32) -> (i32, i32) {
    %c0_i32 = arith.constant 0 : i32
    %c0_i32_0 = arith.constant 0 : i32
    return %arg0, %c0_i32 : i32, i32
  }
  func.func @transform_3(%arg0: i32) -> (i32, i32) {
    %c0_i32 = arith.constant 0 : i32
    %c0_i32_0 = arith.constant 0 : i32
    %c0_i32_1 = arith.constant 0 : i32
    return %c0_i32, %c0_i32_0 : i32, i32
  }
  func.func @transform_4(%arg0: i32) -> (i32, i32) {
    %c0_i32 = arith.constant 0 : i32
    %c0_i32_0 = arith.constant 0 : i32
    %c0_i32_1 = arith.constant 0 : i32
    return %c0_i32, %c0_i32_0 : i32, i32
  }
  func.func @transform_5(%arg0: i32) -> (i32, i32) {
    %c0_i32 = arith.constant 0 : i32
    %c0_i32_0 = arith.constant 0 : i32
    %c0_i32_1 = arith.constant 0 : i32
    return %c0_i32, %c0_i32_0 : i32, i32
  }
  func.func @transform_6(%arg0: i32) -> (i32, i32) {
    %c0_i32 = arith.constant 0 : i32
    %c0_i32_0 = arith.constant 0 : i32
    %c0_i32_1 = arith.constant 0 : i32
    return %c0_i32, %c0_i32_0 : i32, i32
  }
  func.func @transform_7(%arg0: i32) -> (i32, i32) {
    %c0_i32 = arith.constant 0 : i32
    %c0_i32_0 = arith.constant 0 : i32
    %c0_i32_1 = arith.constant 0 : i32
    return %c0_i32, %c0_i32_0 : i32, i32
  }
  func.func @transform_8(%arg0: i32) -> (i32, i32) {
    %c0_i32 = arith.constant 0 : i32
    %c0_i32_0 = arith.constant 0 : i32
    %c0_i32_1 = arith.constant 0 : i32
    return %c0_i32, %c0_i32_0 : i32, i32
  }
  func.func @transform_9(%arg0: i32) -> (i32, i32) {
    %c0_i32 = arith.constant 0 : i32
    %c0_i32_0 = arith.constant 0 : i32
    %c0_i32_1 = arith.constant 0 : i32
    return %c0_i32, %c0_i32_0 : i32, i32
  }
  func.func @transform_10(%arg0: i32) -> (i32, i32) {
    %c0_i32 = arith.constant 0 : i32
    %c0_i32_0 = arith.constant 0 : i32
    %c0_i32_1 = arith.constant 0 : i32
    return %c0_i32, %c0_i32_0 : i32, i32
  }
  func.func @transform_11(%arg0: i32) -> (i32, i32) {
    %c0_i32 = arith.constant 0 : i32
    %c0_i32_0 = arith.constant 0 : i32
    %c0_i32_1 = arith.constant 0 : i32
    return %c0_i32, %c0_i32_0 : i32, i32
  }
  func.func @transform_12(%arg0: i32) -> (i32, i32) {
    %c0_i32 = arith.constant 0 : i32
    %c0_i32_0 = arith.constant 0 : i32
    %c0_i32_1 = arith.constant 0 : i32
    return %c0_i32, %c0_i32_0 : i32, i32
  }
  func.func @transform_13(%arg0: i32) -> (i32, i32) {
    %c0_i32 = arith.constant 0 : i32
    %c0_i32_0 = arith.constant 0 : i32
    %c0_i32_1 = arith.constant 0 : i32
    return %c0_i32, %c0_i32_0 : i32, i32
  }
  func.func @transform_14(%arg0: i32) -> (i32, i32) {
    %c0_i32 = arith.constant 0 : i32
    %c0_i32_0 = arith.constant 0 : i32
    %c0_i32_1 = arith.constant 0 : i32
    return %c0_i32, %c0_i32_0 : i32, i32
  }
  func.func @transform_15(%arg0: i32) -> (i32, i32) {
    %c0_i32 = arith.constant 0 : i32
    %c0_i32_0 = arith.constant 0 : i32
    return %arg0, %c0_i32 : i32, i32
  }
  func.func @transform_16(%arg0: i32) -> (i32, i32, i32) {
    %c0_i32 = arith.constant 0 : i32
    %c0_i32_0 = arith.constant 0 : i32
    %c0_i32_1 = arith.constant 0 : i32
    return %arg0, %c0_i32, %c0_i32_0 : i32, i32, i32
  }
}

</mosaic_0001>

<llo_original>
// kernel: tpu_custom_call.1
$region0: #{tpu_custom_call.1}
  #allocation0 [shape = 'u32[]', space=smem, size = 0x4, offset = 0x4, fixed_abs, tag = 'smem constant byte address 0x4 - core index']
  #allocation1 [shape = 'u32[144,128]{1,0:T(1,128)}', space=vmem, size = 0x12000, scoped, tag = 'internal scratch']
  %s0 = inlined_call_operand.hbm [shape: f32[2,32], index: 0, kind: input, shape index: {}]
  %s1 = inlined_call_operand.hbm [shape: bf16[16,32], index: 1, kind: input, shape index: {}]
  %s2 = inlined_call_operand.hbm [shape: bf16[16,32], index: 2, kind: input, shape index: {}]
  %s3 = inlined_call_operand.vmem [shape: bf16[32,64], index: 3, kind: input, shape index: {}]
  %s4 = inlined_call_operand.vmem [shape: bf16[32,64], index: 4, kind: input, shape index: {}]
  %s5 = inlined_call_operand.vmem [shape: bf16[32,64], index: 5, kind: input, shape index: {}]
  %s6 = inlined_call_operand.vmem [shape: bf16[64,32], index: 6, kind: input, shape index: {}]
  %s7 = inlined_call_operand.vmem [shape: f32[1,32], index: 7, kind: input, shape index: {}]
  %s8 = inlined_call_operand.vmem [shape: f32[1,32], index: 8, kind: input, shape index: {}]
  %s9 = inlined_call_operand.vmem [shape: bf16[32,32], index: 9, kind: input, shape index: {}]
  %s10 = inlined_call_operand.vmem [shape: f32[1,32], index: 10, kind: input, shape index: {}]
  %s11 = inlined_call_operand.hbm [shape: bf16[32,32], index: 11, kind: input, shape index: {}]
  %s12 = inlined_call_operand.vmem [shape: f32[1,32], index: 12, kind: input, shape index: {}]
  %s13 = inlined_call_operand.vmem [shape: f32[1,32], index: 13, kind: input, shape index: {}]
  %s14 = inlined_call_operand.vmem [shape: f32[1,32], index: 14, kind: input, shape index: {}]
  %s15 = inlined_call_operand.hbm [shape: f32[2,32], index: 15, kind: output, shape index: {0}]
  %s16 = inlined_call_operand.hbm [shape: f32[2,1,32], index: 16, kind: output, shape index: {1}]
  %17 = xla_tuple %s15, %s16
  %s18 = sld [smem:[#allocation0]]
  $region94: #{tpu_custom_call.1} parent=0
    _
  %s20 = ssub.s32 1, %s18
  %s21 = scalar_select 0, %s20, %s18
  $region1: #{tpu_custom_call.1} parent=0
    #allocation2 [shape = 'u8[1024]{0}', space=vmem, size = 0x400, scoped, tag = 'input window, operand 0, single buffered']
    #allocation3 [shape = 's32[1]{0}', space=sflag, size = 0x4, scoped, tag = 'scoped memory for tpu_custom_call.1']
    #allocation4 [shape = 's32[1]{0}', space=sflag, size = 0x4, scoped, tag = 'scoped memory for tpu_custom_call.1']
    #allocation5 [shape = 'u8[4096]{0}', space=vmem, size = 0x1000, scoped, tag = 'input window, operand 1, single buffered']
    #allocation6 [shape = 's32[1]{0}', space=sflag, size = 0x4, scoped, tag = 'scoped memory for tpu_custom_call.1']
    #allocation7 [shape = 'u8[4096]{0}', space=vmem, size = 0x1000, scoped, tag = 'input window, operand 2, single buffered']
    #allocation8 [shape = 'u8[8192]{0}', space=vmem, size = 0x2000, scoped, tag = 'input window, operand 11, single buffered']
    #allocation9 [shape = 's32[1]{0}', space=sflag, size = 0x4, scoped, tag = 'scoped memory for tpu_custom_call.1']
    #allocation10 [shape = 'u8[1024]{0}', space=vmem, size = 0x400, scoped, tag = 'output window, operand 0, single buffered']
    #allocation11 [shape = 'u8[1024]{0}', space=vmem, size = 0x400, scoped, tag = 'output window, operand 1, single buffered']
    #allocation12 [shape = 's32[1]{0}', space=sflag, size = 0x4, scoped, tag = 'scoped memory for tpu_custom_call.1']
    %22 = vsyncpa [#allocation3], 0
    %23 = vsyncpa [#allocation6], 0
    %24 = vsyncpa [#allocation9], 0
    %25 = vsyncpa [#allocation4], 0
    %26 = vsyncpa [#allocation12], 0
    // Predicated region
    $region2: #{tpu_custom_call.1} parent=1 // pred_check
      _
    $region3: #{tpu_custom_call.1} parent=1 // pred_check_branch
      %28 = sbr.rel (0) target = $region5
    $region4: #{tpu_custom_call.1} parent=1 // pred_region
      %s30 = ssub.s32 32, 32
      %31 = vsyncadd [#allocation3], %s30
      %s33 = sshll.u32 [#allocation2], 4
      %s34 = int_to_ptr.vmem [resolvable:$true] %s33
      %36 = dma.hbm_to_vmem [thread:$0]  %s0, 32, %s34, [#allocation3]
    $region5: #{tpu_custom_call.1} parent=1 // pred_fallthru
      _
    // Predicated region
    $region6: #{tpu_custom_call.1} parent=1 // pred_check
      _
    $region7: #{tpu_custom_call.1} parent=1 // pred_check_branch
      %38 = sbr.rel (0) target = $region9
    $region8: #{tpu_custom_call.1} parent=1 // pred_region
      %s40 = ssub.s32 128, 128
      %41 = vsyncadd [#allocation6], %s40
      %s42 = sshll.u32 [#allocation5], 4
      %s43 = int_to_ptr.vmem [resolvable:$true] %s42
      %48 = dma.hbm_to_vmem [thread:$0]  %s1, 128, %s43, [#allocation6], 64, 64, 4
    $region9: #{tpu_custom_call.1} parent=1 // pred_fallthru
      _
    // Predicated region
    $region10: #{tpu_custom_call.1} parent=1 // pred_check
      _
    $region11: #{tpu_custom_call.1} parent=1 // pred_check_branch
      %50 = sbr.rel (0) target = $region13
    $region12: #{tpu_custom_call.1} parent=1 // pred_region
      %s52 = ssub.s32 128, 128
      %53 = vsyncadd [#allocation6], %s52
      %s54 = sshll.u32 [#allocation7], 4
      %s55 = int_to_ptr.vmem [resolvable:$true] %s54
      %60 = dma.hbm_to_vmem [thread:$0]  %s2, 128, %s55, [#allocation6], 64, 64, 4
    $region13: #{tpu_custom_call.1} parent=1 // pred_fallthru
      _
    // Predicated region
    $region14: #{tpu_custom_call.1} parent=1 // pred_check
      _
    $region15: #{tpu_custom_call.1} parent=1 // pred_check_branch
      %62 = sbr.rel (0) target = $region17
    $region16: #{tpu_custom_call.1} parent=1 // pred_region
      _
    $region17: #{tpu_custom_call.1} parent=1 // pred_fallthru
      _
    // Predicated region
    $region18: #{tpu_custom_call.1} parent=1 // pred_check
      _
    $region19: #{tpu_custom_call.1} parent=1 // pred_check_branch
      %64 = sbr.rel (0) target = $region21
    $region20: #{tpu_custom_call.1} parent=1 // pred_region
      _
    $region21: #{tpu_custom_call.1} parent=1 // pred_fallthru
      _
    // Predicated region
    $region22: #{tpu_custom_call.1} parent=1 // pred_check
      _
    $region23: #{tpu_custom_call.1} parent=1 // pred_check_branch
      %66 = sbr.rel (0) target = $region25
    $region24: #{tpu_custom_call.1} parent=1 // pred_region
      _
    $region25: #{tpu_custom_call.1} parent=1 // pred_fallthru
      _
    // Predicated region
    $region26: #{tpu_custom_call.1} parent=1 // pred_check
      _
    $region27: #{tpu_custom_call.1} parent=1 // pred_check_branch
      %68 = sbr.rel (0) target = $region29
    $region28: #{tpu_custom_call.1} parent=1 // pred_region
      _
    $region29: #{tpu_custom_call.1} parent=1 // pred_fallthru
      _
    // Predicated region
    $region30: #{tpu_custom_call.1} parent=1 // pred_check
      _
    $region31: #{tpu_custom_call.1} parent=1 // pred_check_branch
      %70 = sbr.rel (0) target = $region33
    $region32: #{tpu_custom_call.1} parent=1 // pred_region
      _
    $region33: #{tpu_custom_call.1} parent=1 // pred_fallthru
      _
    // Predicated region
    $region34: #{tpu_custom_call.1} parent=1 // pred_check
      _
    $region35: #{tpu_custom_call.1} parent=1 // pred_check_branch
      %72 = sbr.rel (0) target = $region37
    $region36: #{tpu_custom_call.1} parent=1 // pred_region
      _
    $region37: #{tpu_custom_call.1} parent=1 // pred_fallthru
      _
    // Predicated region
    $region38: #{tpu_custom_call.1} parent=1 // pred_check
      _
    $region39: #{tpu_custom_call.1} parent=1 // pred_check_branch
      %74 = sbr.rel (0) target = $region41
    $region40: #{tpu_custom_call.1} parent=1 // pred_region
      _
    $region41: #{tpu_custom_call.1} parent=1 // pred_fallthru
      _
    // Predicated region
    $region42: #{tpu_custom_call.1} parent=1 // pred_check
      _
    $region43: #{tpu_custom_call.1} parent=1 // pred_check_branch
      %76 = sbr.rel (0) target = $region45
    $region44: #{tpu_custom_call.1} parent=1 // pred_region
      _
    $region45: #{tpu_custom_call.1} parent=1 // pred_fallthru
      _
    // Predicated region
    $region46: #{tpu_custom_call.1} parent=1 // pred_check
      _
    $region47: #{tpu_custom_call.1} parent=1 // pred_check_branch
      %78 = sbr.rel (0) target = $region49
    $region48: #{tpu_custom_call.1} parent=1 // pred_region
      %s80 = ssub.s32 256, 256
      %81 = vsyncadd [#allocation9], %s80
      %s82 = sshll.u32 [#allocation8], 4
      %s83 = int_to_ptr.vmem [resolvable:$true] %s82
      %88 = dma.hbm_to_vmem [thread:$0]  %s11, 256, %s83, [#allocation9], 64, 64, 4
    $region49: #{tpu_custom_call.1} parent=1 // pred_fallthru
      _
    // Predicated region
    $region50: #{tpu_custom_call.1} parent=1 // pred_check
      _
    $region51: #{tpu_custom_call.1} parent=1 // pred_check_branch
      %90 = sbr.rel (0) target = $region53
    $region52: #{tpu_custom_call.1} parent=1 // pred_region
      _
    $region53: #{tpu_custom_call.1} parent=1 // pred_fallthru
      _
    // Predicated region
    $region54: #{tpu_custom_call.1} parent=1 // pred_check
      _
    $region55: #{tpu_custom_call.1} parent=1 // pred_check_branch
      %92 = sbr.rel (0) target = $region57
    $region56: #{tpu_custom_call.1} parent=1 // pred_region
      _
    $region57: #{tpu_custom_call.1} parent=1 // pred_fallthru
      _
    // Predicated region
    $region58: #{tpu_custom_call.1} parent=1 // pred_check
      _
    $region59: #{tpu_custom_call.1} parent=1 // pred_check_branch
      %94 = sbr.rel (0) target = $region61
    $region60: #{tpu_custom_call.1} parent=1 // pred_region
      _
    $region61: #{tpu_custom_call.1} parent=1 // pred_fallthru
      _
    // Predicated region
    $region62: #{tpu_custom_call.1} parent=1 // pred_check
      _
    $region63: #{tpu_custom_call.1} parent=1 // pred_check_branch
      %96 = sbr.rel (0) target = $region65
    $region64: #{tpu_custom_call.1} parent=1 // pred_region
      %97 = dma.done [#allocation3], 32
    $region65: #{tpu_custom_call.1} parent=1 // pred_fallthru
      _
    // Predicated region
    $region66: #{tpu_custom_call.1} parent=1 // pred_check
      _
    $region67: #{tpu_custom_call.1} parent=1 // pred_check_branch
      %99 = sbr.rel (0) target = $region69
    $region68: #{tpu_custom_call.1} parent=1 // pred_region
      %100 = dma.done [#allocation6], 128
    $region69: #{tpu_custom_call.1} parent=1 // pred_fallthru
      _
    // Predicated region
    $region70: #{tpu_custom_call.1} parent=1 // pred_check
      _
    $region71: #{tpu_custom_call.1} parent=1 // pred_check_branch
      %102 = sbr.rel (0) target = $region73
    $region72: #{tpu_custom_call.1} parent=1 // pred_region
      %103 = dma.done [#allocation6], 128
    $region73: #{tpu_custom_call.1} parent=1 // pred_fallthru
      _
    // Predicated region
    $region74: #{tpu_custom_call.1} parent=1 // pred_check
      _
    $region75: #{tpu_custom_call.1} parent=1 // pred_check_branch
      %105 = sbr.rel (0) target = $region77
    $region76: #{tpu_custom_call.1} parent=1 // pred_region
      %106 = dma.done [#allocation9], 256
    $region77: #{tpu_custom_call.1} parent=1 // pred_fallthru
      _
    %v108 = vld [vmem:[#allocation2] sm:$0x3]
    %v109 = vpack.c.bf16 %v108, %v108
    %v110 = vld [vmem:[%s3] sm:$0xf]
    %v111 = vld [vmem:[%s3 + $0x4] sm:$0xf]
    %v112 = vld [vmem:[%s3 + $0x8] sm:$0xf]
    %v113 = vld [vmem:[%s3 + $0xc] sm:$0xf]
    %v118 = vunpack.c.l.b16 %v110
    %v119 = vunpack.c.l.b16 %v111
    %v120 = vunpack.c.l.b16 %v112
    %v121 = vunpack.c.l.b16 %v113
    %v122 = vpack.c.b16 %v119, %v118
    %v123 = vpack.c.b16 %v121, %v120
    %vm126 = vcmask 261120
    %v128 = vsel %vm126, %v109, 0
    %130 = vmatprep.subr.bf16.mxu0 0
    %131 = vmatpush1.bf16.msra.mxu0 %v122
    %132 = vmatprep.subr.bf16.mxu0 0
    %133 = vmatpush1.bf16.msra.mxu0 %v123
    %134 = vmatprep.subr.bf16.mxu0 0
    %135 = vmatpush1.bf16.msra.mxu0 0
    %136 = vmatprep.subr.bf16.mxu0 0
    %137 = vmatpush1.bf16.msra.mxu0 0
    %138 = vmatprep.subr.bf16.mxu0 0
    %139 = vmatpush1.bf16.msra.mxu0 0
    %140 = vmatprep.subr.bf16.mxu0 0
    %141 = vmatpush1.bf16.msra.mxu0 0
    %142 = vmatprep.subr.bf16.mxu0 0
    %143 = vmatpush1.bf16.msra.mxu0 0
    %144 = vmatprep.subr.bf16.mxu0 0
    %145 = vmatpush1.bf16.msra.mxu0 0
    %146 = vmatprep.subr.bf16.mxu0 0
    %147 = vmatpush1.bf16.msra.mxu0 0
    %148 = vmatprep.subr.bf16.mxu0 0
    %149 = vmatpush1.bf16.msra.mxu0 0
    %150 = vmatprep.subr.bf16.mxu0 0
    %151 = vmatpush1.bf16.msra.mxu0 0
    %152 = vmatprep.subr.bf16.mxu0 0
    %153 = vmatpush1.bf16.msra.mxu0 0
    %154 = vmatprep.subr.bf16.mxu0 0
    %155 = vmatpush1.bf16.msra.mxu0 0
    %156 = vmatprep.subr.bf16.mxu0 0
    %157 = vmatpush1.bf16.msra.mxu0 0
    %158 = vmatprep.subr.bf16.mxu0 0
    %159 = vmatpush1.bf16.msra.mxu0 0
    %160 = vmatprep.subr.bf16.mxu0 0
    %161 = vmatpush1.bf16.msra.mxu0 0
    %162 = vmatprep.mubr.bf16.mxu0 0
    %163 = vmatmul.mubr.bf16.gmra.mrb[0].mxu0 %v128
    %v164 = vpop.f32.mrb[0].mxu0
    %v165 = vadd.f32 0.0, %v164
    %v166 = vpop.f32.mrb[0].mxu0
    %v167 = vpop.f32.mrb[0].mxu0
    %v168 = vpop.f32.mrb[0].mxu0
    %169 = vdwg.mxu0
    %v170 = vld [vmem:[#allocation5] sm:$0xf]
    %v171 = vld [vmem:[#allocation5 + $0x4] sm:$0xf]
    %v172 = vld [vmem:[%s4] sm:$0xf]
    %v173 = vld [vmem:[%s4 + $0x4] sm:$0xf]
    %v174 = vld [vmem:[%s4 + $0x8] sm:$0xf]
    %v175 = vld [vmem:[%s4 + $0xc] sm:$0xf]
    %v178 = vunpack.c.l.b16 %v170
    %v179 = vunpack.c.l.b16 %v171
    %v180 = vpack.c.b16 %v179, %v178
    %v185 = vunpack.c.l.b16 %v172
    %v186 = vunpack.c.l.b16 %v173
    %v187 = vunpack.c.l.b16 %v174
    %v188 = vunpack.c.l.b16 %v175
    %v189 = vpack.c.b16 %v186, %v185
    %v190 = vpack.c.b16 %v188, %v187
    %v194 = vsel %vm126, %v180, 0
    %196 = vmatprep.subr.bf16.mxu0 0
    %197 = vmatpush1.bf16.msra.mxu0 %v189
    %198 = vmatprep.subr.bf16.mxu0 0
    %199 = vmatpush1.bf16.msra.mxu0 %v190
    %200 = vmatprep.subr.bf16.mxu0 0
    %201 = vmatpush1.bf16.msra.mxu0 0
    %202 = vmatprep.subr.bf16.mxu0 0
    %203 = vmatpush1.bf16.msra.mxu0 0
    %204 = vmatprep.subr.bf16.mxu0 0
    %205 = vmatpush1.bf16.msra.mxu0 0
    %206 = vmatprep.subr.bf16.mxu0 0
    %207 = vmatpush1.bf16.msra.mxu0 0
    %208 = vmatprep.subr.bf16.mxu0 0
    %209 = vmatpush1.bf16.msra.mxu0 0
    %210 = vmatprep.subr.bf16.mxu0 0
    %211 = vmatpush1.bf16.msra.mxu0 0
    %212 = vmatprep.subr.bf16.mxu0 0
    %213 = vmatpush1.bf16.msra.mxu0 0
    %214 = vmatprep.subr.bf16.mxu0 0
    %215 = vmatpush1.bf16.msra.mxu0 0
    %216 = vmatprep.subr.bf16.mxu0 0
    %217 = vmatpush1.bf16.msra.mxu0 0
    %218 = vmatprep.subr.bf16.mxu0 0
    %219 = vmatpush1.bf16.msra.mxu0 0
    %220 = vmatprep.subr.bf16.mxu0 0
    %221 = vmatpush1.bf16.msra.mxu0 0
    %222 = vmatprep.subr.bf16.mxu0 0
    %223 = vmatpush1.bf16.msra.mxu0 0
    %224 = vmatprep.subr.bf16.mxu0 0
    %225 = vmatpush1.bf16.msra.mxu0 0
    %226 = vmatprep.subr.bf16.mxu0 0
    %227 = vmatpush1.bf16.msra.mxu0 0
    %228 = vmatprep.mubr.bf16.mxu0 0
    %229 = vmatmul.mubr.bf16.gmra.mrb[0].mxu0 %v194
    %v230 = vpop.f32.mrb[0].mxu0
    %v231 = vadd.f32 0.0, %v230
    %v232 = vpop.f32.mrb[0].mxu0
    %v233 = vpop.f32.mrb[0].mxu0
    %v234 = vadd.f32 0.0, %v233
    %v235 = vpop.f32.mrb[0].mxu0
    %236 = vdwg.mxu0
    %v237 = vld [vmem:[#allocation7] sm:$0xf]
    %v238 = vld [vmem:[#allocation7 + $0x4] sm:$0xf]
    %v239 = vld [vmem:[%s5] sm:$0xf]
    %v240 = vld [vmem:[%s5 + $0x4] sm:$0xf]
    %v241 = vld [vmem:[%s5 + $0x8] sm:$0xf]
    %v242 = vld [vmem:[%s5 + $0xc] sm:$0xf]
    %v245 = vunpack.c.l.b16 %v237
    %v246 = vunpack.c.l.b16 %v238
    %v247 = vpack.c.b16 %v246, %v245
    %v252 = vunpack.c.l.b16 %v239
    %v253 = vunpack.c.l.b16 %v240
    %v254 = vunpack.c.l.b16 %v241
    %v255 = vunpack.c.l.b16 %v242
    %v256 = vpack.c.b16 %v253, %v252
    %v257 = vpack.c.b16 %v255, %v254
    %v261 = vsel %vm126, %v247, 0
    %263 = vmatprep.subr.bf16.mxu0 0
    %264 = vmatpush1.bf16.msra.mxu0 %v256
    %265 = vmatprep.subr.bf16.mxu0 0
    %266 = vmatpush1.bf16.msra.mxu0 %v257
    %267 = vmatprep.subr.bf16.mxu0 0
    %268 = vmatpush1.bf16.msra.mxu0 0
    %269 = vmatprep.subr.bf16.mxu0 0
    %270 = vmatpush1.bf16.msra.mxu0 0
    %271 = vmatprep.subr.bf16.mxu0 0
    %272 = vmatpush1.bf16.msra.mxu0 0
    %273 = vmatprep.subr.bf16.mxu0 0
    %274 = vmatpush1.bf16.msra.mxu0 0
    %275 = vmatprep.subr.bf16.mxu0 0
    %276 = vmatpush1.bf16.msra.mxu0 0
    %277 = vmatprep.subr.bf16.mxu0 0
    %278 = vmatpush1.bf16.msra.mxu0 0
    %279 = vmatprep.subr.bf16.mxu0 0
    %280 = vmatpush1.bf16.msra.mxu0 0
    %281 = vmatprep.subr.bf16.mxu0 0
    %282 = vmatpush1.bf16.msra.mxu0 0
    %283 = vmatprep.subr.bf16.mxu0 0
    %284 = vmatpush1.bf16.msra.mxu0 0
    %285 = vmatprep.subr.bf16.mxu0 0
    %286 = vmatpush1.bf16.msra.mxu0 0
    %287 = vmatprep.subr.bf16.mxu0 0
    %288 = vmatpush1.bf16.msra.mxu0 0
    %289 = vmatprep.subr.bf16.mxu0 0
    %290 = vmatpush1.bf16.msra.mxu0 0
    %291 = vmatprep.subr.bf16.mxu0 0
    %292 = vmatpush1.bf16.msra.mxu0 0
    %293 = vmatprep.subr.bf16.mxu0 0
    %294 = vmatpush1.bf16.msra.mxu0 0
    %295 = vmatprep.mubr.bf16.mxu0 0
    %296 = vmatmul.mubr.bf16.gmra.mrb[0].mxu0 %v261
    %v297 = vpop.f32.mrb[0].mxu0
    %v298 = vadd.f32 0.0, %v297
    %v299 = vpop.f32.mrb[0].mxu0
    %v300 = vpop.f32.mrb[0].mxu0
    %v301 = vadd.f32 0.0, %v300
    %v302 = vpop.f32.mrb[0].mxu0
    %303 = vdwg.mxu0
    %v306 = vunpack.c.l.s4 1966171168
    %v307 = vunpack.c.0.s8 %v306
    %v308 = vlaneseq
    %v309 = vshrl.u32 %v308, 7
    %v310 = vsub.s32 %v307, %v309
    %v311 = vrot.slane %v165, %v310
    %v312 = vcombine.high %v311, %v311
    %v314 = vunpack.c.l.s4 1966171168
    %v315 = vunpack.c.0.s8 %v314
    %v316 = vlaneseq
    %v317 = vshrl.u32 %v316, 7
    %v318 = vsub.s32 %v315, %v317
    %v319 = vrot.slane %v311, %v318
    %v321 = vunpack.c.l.s4 1966171168
    %v322 = vunpack.c.0.s8 %v321
    %v323 = vlaneseq
    %v324 = vshrl.u32 %v323, 7
    %v325 = vsub.s32 %v322, %v324
    %v326 = vrot.slane %v312, %v325
    %v329 = vpack.c.bf16 %v319, %v319
    %v330 = vpack.c.bf16 %v326, %v326
    %v331 = vpack.c.bf16 %v231, %v231
    %v332 = vpack.c.bf16 %v234, %v234
    %v333 = vpack.c.bf16 %v298, %v298
    %v334 = vpack.c.bf16 %v301, %v301
    %vm335 = vcmask 130048
    %v337 = vsel %vm335, %v329, 0
    %v340 = vsel %vm335, %v331, 0
    %342 = vmatprep.subr.bf16.mxu0 0
    %343 = vmatpush1.bf16.xpose.msra.mxu0 %v340
    %344 = vmatprep.subr.bf16.mxu0 0
    %345 = vmatpush1.bf16.xpose.msra.mxu0 0
    %346 = vmatprep.subr.bf16.mxu0 0
    %347 = vmatpush1.bf16.xpose.msra.mxu0 0
    %348 = vmatprep.subr.bf16.mxu0 0
    %349 = vmatpush1.bf16.xpose.msra.mxu0 0
    %350 = vmatprep.subr.bf16.mxu0 0
    %351 = vmatpush1.bf16.xpose.msra.mxu0 0
    %352 = vmatprep.subr.bf16.mxu0 0
    %353 = vmatpush1.bf16.xpose.msra.mxu0 0
    %354 = vmatprep.subr.bf16.mxu0 0
    %355 = vmatpush1.bf16.xpose.msra.mxu0 0
    %356 = vmatprep.subr.bf16.mxu0 0
    %357 = vmatpush1.bf16.xpose.msra.mxu0 0
    %358 = vmatprep.subr.bf16.mxu0 0
    %359 = vmatpush1.bf16.xpose.msra.mxu0 0
    %360 = vmatprep.subr.bf16.mxu0 0
    %361 = vmatpush1.bf16.xpose.msra.mxu0 0
    %362 = vmatprep.subr.bf16.mxu0 0
    %363 = vmatpush1.bf16.xpose.msra.mxu0 0
    %364 = vmatprep.subr.bf16.mxu0 0
    %365 = vmatpush1.bf16.xpose.msra.mxu0 0
    %366 = vmatprep.subr.bf16.mxu0 0
    %367 = vmatpush1.bf16.xpose.msra.mxu0 0
    %368 = vmatprep.subr.bf16.mxu0 0
    %369 = vmatpush1.bf16.xpose.msra.mxu0 0
    %370 = vmatprep.subr.bf16.mxu0 0
    %371 = vmatpush1.bf16.xpose.msra.mxu0 0
    %372 = vmatprep.subr.bf16.mxu0 0
    %373 = vmatpush1.bf16.xpose.msra.mxu0 0
    %374 = vmatprep.mubr.bf16.mxu0 0
    %375 = vmatmul.mubr.bf16.gmra.mrb[0].mxu0 %v337
    %v376 = vpop.f32.mrb[0].mxu0
    %v377 = vadd.f32 0.0, %v376
    %v378 = vpop.f32.mrb[0].mxu0
    %v379 = vpop.f32.mrb[0].mxu0
    %v380 = vpop.f32.mrb[0].mxu0
    %381 = vdwg.mxu0
    %v383 = vsel %vm335, %v330, 0
    %v386 = vsel %vm335, %v332, 0
    %388 = vmatprep.subr.bf16.mxu0 0
    %389 = vmatpush1.bf16.xpose.msra.mxu0 %v386
    %390 = vmatprep.subr.bf16.mxu0 0
    %391 = vmatpush1.bf16.xpose.msra.mxu0 0
    %392 = vmatprep.subr.bf16.mxu0 0
    %393 = vmatpush1.bf16.xpose.msra.mxu0 0
    %394 = vmatprep.subr.bf16.mxu0 0
    %395 = vmatpush1.bf16.xpose.msra.mxu0 0
    %396 = vmatprep.subr.bf16.mxu0 0
    %397 = vmatpush1.bf16.xpose.msra.mxu0 0
    %398 = vmatprep.subr.bf16.mxu0 0
    %399 = vmatpush1.bf16.xpose.msra.mxu0 0
    %400 = vmatprep.subr.bf16.mxu0 0
    %401 = vmatpush1.bf16.xpose.msra.mxu0 0
    %402 = vmatprep.subr.bf16.mxu0 0
    %403 = vmatpush1.bf16.xpose.msra.mxu0 0
    %404 = vmatprep.subr.bf16.mxu0 0
    %405 = vmatpush1.bf16.xpose.msra.mxu0 0
    %406 = vmatprep.subr.bf16.mxu0 0
    %407 = vmatpush1.bf16.xpose.msra.mxu0 0
    %408 = vmatprep.subr.bf16.mxu0 0
    %409 = vmatpush1.bf16.xpose.msra.mxu0 0
    %410 = vmatprep.subr.bf16.mxu0 0
    %411 = vmatpush1.bf16.xpose.msra.mxu0 0
    %412 = vmatprep.subr.bf16.mxu0 0
    %413 = vmatpush1.bf16.xpose.msra.mxu0 0
    %414 = vmatprep.subr.bf16.mxu0 0
    %415 = vmatpush1.bf16.xpose.msra.mxu0 0
    %416 = vmatprep.subr.bf16.mxu0 0
    %417 = vmatpush1.bf16.xpose.msra.mxu0 0
    %418 = vmatprep.subr.bf16.mxu0 0
    %419 = vmatpush1.bf16.xpose.msra.mxu0 0
    %420 = vmatprep.mubr.bf16.mxu0 0
    %421 = vmatmul.mubr.bf16.gmra.mrb[0].mxu0 %v383
    %v422 = vpop.f32.mrb[0].mxu0
    %v423 = vadd.f32 0.0, %v422
    %v424 = vpop.f32.mrb[0].mxu0
    %v425 = vpop.f32.mrb[0].mxu0
    %v426 = vpop.f32.mrb[0].mxu0
    %427 = vdwg.mxu0
    %vm428 = vcmask 57344
    %v429 = vsel %vm428, %v377, -inf
    %430 = vmax.xlane.f32.xlu0 %v429
    %v431 = vpop.xlane.xlu0 %430
    %v432 = vsel %vm428, %v423, -inf
    %433 = vmax.xlane.f32.xlu0 %v432
    %v434 = vpop.xlane.xlu0 %433
    %v435 = vsub.f32 %v377, %v431
    %v436 = vsub.f32 %v423, %v434
    %v437 = vmul.f32 %v435, 1.442695
    %v438 = vpow.pop %v437
    %v439 = vmul.f32 %v436, 1.442695
    %v440 = vpow.pop %v439
    %v441 = vsel %vm428, %v438, 0.0
    %442 = vadd.xlane.f32.xlu0 %v441
    %v443 = vpop.xlane.xlu0 %442
    %v444 = vsel %vm428, %v440, 0.0
    %445 = vadd.xlane.f32.xlu0 %v444
    %v446 = vpop.xlane.xlu0 %445
    %v447 = vrcp.pop %v443
    %v448 = vmul.f32 %v438, %v447
    %v449 = vrcp.pop %v446
    %v450 = vmul.f32 %v440, %v449
    %v451 = vpack.c.bf16 %v448, %v448
    %v452 = vpack.c.bf16 %v450, %v450
    %vm453 = vcmask 64512
    %v455 = vsel %vm453, %v451, 0
    %vm457 = vcmask 1043456
    %v459 = vsel %vm457, %v333, 0
    %461 = vmatprep.subr.bf16.mxu0 0
    %462 = vmatpush1.bf16.msra.mxu0 %v459
    %463 = vmatprep.subr.bf16.mxu0 0
    %464 = vmatpush1.bf16.msra.mxu0 0
    %465 = vmatprep.subr.bf16.mxu0 0
    %466 = vmatpush1.bf16.msra.mxu0 0
    %467 = vmatprep.subr.bf16.mxu0 0
    %468 = vmatpush1.bf16.msra.mxu0 0
    %469 = vmatprep.subr.bf16.mxu0 0
    %470 = vmatpush1.bf16.msra.mxu0 0
    %471 = vmatprep.subr.bf16.mxu0 0
    %472 = vmatpush1.bf16.msra.mxu0 0
    %473 = vmatprep.subr.bf16.mxu0 0
    %474 = vmatpush1.bf16.msra.mxu0 0
    %475 = vmatprep.subr.bf16.mxu0 0
    %476 = vmatpush1.bf16.msra.mxu0 0
    %477 = vmatprep.subr.bf16.mxu0 0
    %478 = vmatpush1.bf16.msra.mxu0 0
    %479 = vmatprep.subr.bf16.mxu0 0
    %480 = vmatpush1.bf16.msra.mxu0 0
    %481 = vmatprep.subr.bf16.mxu0 0
    %482 = vmatpush1.bf16.msra.mxu0 0
    %483 = vmatprep.subr.bf16.mxu0 0
    %484 = vmatpush1.bf16.msra.mxu0 0
    %485 = vmatprep.subr.bf16.mxu0 0
    %486 = vmatpush1.bf16.msra.mxu0 0
    %487 = vmatprep.subr.bf16.mxu0 0
    %488 = vmatpush1.bf16.msra.mxu0 0
    %489 = vmatprep.subr.bf16.mxu0 0
    %490 = vmatpush1.bf16.msra.mxu0 0
    %491 = vmatprep.subr.bf16.mxu0 0
    %492 = vmatpush1.bf16.msra.mxu0 0
    %493 = vmatprep.mubr.bf16.mxu0 0
    %494 = vmatmul.mubr.bf16.gmra.mrb[0].mxu0 %v455
    %v495 = vpop.f32.mrb[0].mxu0
    %v496 = vadd.f32 0.0, %v495
    %v497 = vpop.f32.mrb[0].mxu0
    %v498 = vpop.f32.mrb[0].mxu0
    %v499 = vpop.f32.mrb[0].mxu0
    %500 = vdwg.mxu0
    %v502 = vsel %vm453, %v452, 0
    %v505 = vsel %vm457, %v334, 0
    %507 = vmatprep.subr.bf16.mxu0 0
    %508 = vmatpush1.bf16.msra.mxu0 %v505
    %509 = vmatprep.subr.bf16.mxu0 0
    %510 = vmatpush1.bf16.msra.mxu0 0
    %511 = vmatprep.subr.bf16.mxu0 0
    %512 = vmatpush1.bf16.msra.mxu0 0
    %513 = vmatprep.subr.bf16.mxu0 0
    %514 = vmatpush1.bf16.msra.mxu0 0
    %515 = vmatprep.subr.bf16.mxu0 0
    %516 = vmatpush1.bf16.msra.mxu0 0
    %517 = vmatprep.subr.bf16.mxu0 0
    %518 = vmatpush1.bf16.msra.mxu0 0
    %519 = vmatprep.subr.bf16.mxu0 0
    %520 = vmatpush1.bf16.msra.mxu0 0
    %521 = vmatprep.subr.bf16.mxu0 0
    %522 = vmatpush1.bf16.msra.mxu0 0
    %523 = vmatprep.subr.bf16.mxu0 0
    %524 = vmatpush1.bf16.msra.mxu0 0
    %525 = vmatprep.subr.bf16.mxu0 0
    %526 = vmatpush1.bf16.msra.mxu0 0
    %527 = vmatprep.subr.bf16.mxu0 0
    %528 = vmatpush1.bf16.msra.mxu0 0
    %529 = vmatprep.subr.bf16.mxu0 0
    %530 = vmatpush1.bf16.msra.mxu0 0
    %531 = vmatprep.subr.bf16.mxu0 0
    %532 = vmatpush1.bf16.msra.mxu0 0
    %533 = vmatprep.subr.bf16.mxu0 0
    %534 = vmatpush1.bf16.msra.mxu0 0
    %535 = vmatprep.subr.bf16.mxu0 0
    %536 = vmatpush1.bf16.msra.mxu0 0
    %537 = vmatprep.subr.bf16.mxu0 0
    %538 = vmatpush1.bf16.msra.mxu0 0
    %539 = vmatprep.mubr.bf16.mxu0 0
    %540 = vmatmul.mubr.bf16.gmra.mrb[0].mxu0 %v502
    %v541 = vpop.f32.mrb[0].mxu0
    %v542 = vadd.f32 0.0, %v541
    %v543 = vpop.f32.mrb[0].mxu0
    %v544 = vpop.f32.mrb[0].mxu0
    %v545 = vpop.f32.mrb[0].mxu0
    %546 = vdwg.mxu0
    %548 = vrot.lane.b32.xlu0 %v329, 112
    %v549 = vpop.permute.xlu0 %548
    %551 = vrot.lane.b32.xlu0 %v331, 112
    %v552 = vpop.permute.xlu0 %551
    %v554 = vsel %vm335, %v549, 0
    %v557 = vsel %vm335, %v552, 0
    %559 = vmatprep.subr.bf16.mxu0 0
    %560 = vmatpush1.bf16.xpose.msra.mxu0 %v557
    %561 = vmatprep.subr.bf16.mxu0 0
    %562 = vmatpush1.bf16.xpose.msra.mxu0 0
    %563 = vmatprep.subr.bf16.mxu0 0
    %564 = vmatpush1.bf16.xpose.msra.mxu0 0
    %565 = vmatprep.subr.bf16.mxu0 0
    %566 = vmatpush1.bf16.xpose.msra.mxu0 0
    %567 = vmatprep.subr.bf16.mxu0 0
    %568 = vmatpush1.bf16.xpose.msra.mxu0 0
    %569 = vmatprep.subr.bf16.mxu0 0
    %570 = vmatpush1.bf16.xpose.msra.mxu0 0
    %571 = vmatprep.subr.bf16.mxu0 0
    %572 = vmatpush1.bf16.xpose.msra.mxu0 0
    %573 = vmatprep.subr.bf16.mxu0 0
    %574 = vmatpush1.bf16.xpose.msra.mxu0 0
    %575 = vmatprep.subr.bf16.mxu0 0
    %576 = vmatpush1.bf16.xpose.msra.mxu0 0
    %577 = vmatprep.subr.bf16.mxu0 0
    %578 = vmatpush1.bf16.xpose.msra.mxu0 0
    %579 = vmatprep.subr.bf16.mxu0 0
    %580 = vmatpush1.bf16.xpose.msra.mxu0 0
    %581 = vmatprep.subr.bf16.mxu0 0
    %582 = vmatpush1.bf16.xpose.msra.mxu0 0
    %583 = vmatprep.subr.bf16.mxu0 0
    %584 = vmatpush1.bf16.xpose.msra.mxu0 0
    %585 = vmatprep.subr.bf16.mxu0 0
    %586 = vmatpush1.bf16.xpose.msra.mxu0 0
    %587 = vmatprep.subr.bf16.mxu0 0
    %588 = vmatpush1.bf16.xpose.msra.mxu0 0
    %589 = vmatprep.subr.bf16.mxu0 0
    %590 = vmatpush1.bf16.xpose.msra.mxu0 0
    %591 = vmatprep.mubr.bf16.mxu0 0
    %592 = vmatmul.mubr.bf16.gmra.mrb[0].mxu0 %v554
    %v593 = vpop.f32.mrb[0].mxu0
    %v594 = vadd.f32 0.0, %v593
    %v595 = vpop.f32.mrb[0].mxu0
    %v596 = vpop.f32.mrb[0].mxu0
    %v597 = vpop.f32.mrb[0].mxu0
    %598 = vdwg.mxu0
    %600 = vrot.lane.b32.xlu0 %v330, 112
    %v601 = vpop.permute.xlu0 %600
    %603 = vrot.lane.b32.xlu0 %v332, 112
    %v604 = vpop.permute.xlu0 %603
    %v606 = vsel %vm335, %v601, 0
    %v609 = vsel %vm335, %v604, 0
    %611 = vmatprep.subr.bf16.mxu0 0
    %612 = vmatpush1.bf16.xpose.msra.mxu0 %v609
    %613 = vmatprep.subr.bf16.mxu0 0
    %614 = vmatpush1.bf16.xpose.msra.mxu0 0
    %615 = vmatprep.subr.bf16.mxu0 0
    %616 = vmatpush1.bf16.xpose.msra.mxu0 0
    %617 = vmatprep.subr.bf16.mxu0 0
    %618 = vmatpush1.bf16.xpose.msra.mxu0 0
    %619 = vmatprep.subr.bf16.mxu0 0
    %620 = vmatpush1.bf16.xpose.msra.mxu0 0
    %621 = vmatprep.subr.bf16.mxu0 0
    %622 = vmatpush1.bf16.xpose.msra.mxu0 0
    %623 = vmatprep.subr.bf16.mxu0 0
    %624 = vmatpush1.bf16.xpose.msra.mxu0 0
    %625 = vmatprep.subr.bf16.mxu0 0
    %626 = vmatpush1.bf16.xpose.msra.mxu0 0
    %627 = vmatprep.subr.bf16.mxu0 0
    %628 = vmatpush1.bf16.xpose.msra.mxu0 0
    %629 = vmatprep.subr.bf16.mxu0 0
    %630 = vmatpush1.bf16.xpose.msra.mxu0 0
    %631 = vmatprep.subr.bf16.mxu0 0
    %632 = vmatpush1.bf16.xpose.msra.mxu0 0
    %633 = vmatprep.subr.bf16.mxu0 0
    %634 = vmatpush1.bf16.xpose.msra.mxu0 0
    %635 = vmatprep.subr.bf16.mxu0 0
    %636 = vmatpush1.bf16.xpose.msra.mxu0 0
    %637 = vmatprep.subr.bf16.mxu0 0
    %638 = vmatpush1.bf16.xpose.msra.mxu0 0
    %639 = vmatprep.subr.bf16.mxu0 0
    %640 = vmatpush1.bf16.xpose.msra.mxu0 0
    %641 = vmatprep.subr.bf16.mxu0 0
    %642 = vmatpush1.bf16.xpose.msra.mxu0 0
    %643 = vmatprep.mubr.bf16.mxu0 0
    %644 = vmatmul.mubr.bf16.gmra.mrb[0].mxu0 %v606
    %v645 = vpop.f32.mrb[0].mxu0
    %v646 = vadd.f32 0.0, %v645
    %v647 = vpop.f32.mrb[0].mxu0
    %v648 = vpop.f32.mrb[0].mxu0
    %v649 = vpop.f32.mrb[0].mxu0
    %650 = vdwg.mxu0
    %v651 = vsel %vm428, %v594, -inf
    %652 = vmax.xlane.f32.xlu0 %v651
    %v653 = vpop.xlane.xlu0 %652
    %v654 = vsel %vm428, %v646, -inf
    %655 = vmax.xlane.f32.xlu0 %v654
    %v656 = vpop.xlane.xlu0 %655
    %v657 = vsub.f32 %v594, %v653
    %v658 = vsub.f32 %v646, %v656
    %v659 = vmul.f32 %v657, 1.442695
    %v660 = vpow.pop %v659
    %v661 = vmul.f32 %v658, 1.442695
    %v662 = vpow.pop %v661
    %v663 = vsel %vm428, %v660, 0.0
    %664 = vadd.xlane.f32.xlu0 %v663
    %v665 = vpop.xlane.xlu0 %664
    %v666 = vsel %vm428, %v662, 0.0
    %667 = vadd.xlane.f32.xlu0 %v666
    %v668 = vpop.xlane.xlu0 %667
    %v669 = vrcp.pop %v665
    %v670 = vmul.f32 %v660, %v669
    %v671 = vrcp.pop %v668
    %v672 = vmul.f32 %v662, %v671
    %v673 = vpack.c.bf16 %v670, %v670
    %v674 = vpack.c.bf16 %v672, %v672
    %676 = vrot.lane.b32.xlu0 %v333, 112
    %v677 = vpop.permute.xlu0 %676
    %v679 = vsel %vm453, %v673, 0
    %v682 = vsel %vm457, %v677, 0
    %684 = vmatprep.subr.bf16.mxu0 0
    %685 = vmatpush1.bf16.msra.mxu0 %v682
    %686 = vmatprep.subr.bf16.mxu0 0
    %687 = vmatpush1.bf16.msra.mxu0 0
    %688 = vmatprep.subr.bf16.mxu0 0
    %689 = vmatpush1.bf16.msra.mxu0 0
    %690 = vmatprep.subr.bf16.mxu0 0
    %691 = vmatpush1.bf16.msra.mxu0 0
    %692 = vmatprep.subr.bf16.mxu0 0
    %693 = vmatpush1.bf16.msra.mxu0 0
    %694 = vmatprep.subr.bf16.mxu0 0
    %695 = vmatpush1.bf16.msra.mxu0 0
    %696 = vmatprep.subr.bf16.mxu0 0
    %697 = vmatpush1.bf16.msra.mxu0 0
    %698 = vmatprep.subr.bf16.mxu0 0
    %699 = vmatpush1.bf16.msra.mxu0 0
    %700 = vmatprep.subr.bf16.mxu0 0
    %701 = vmatpush1.bf16.msra.mxu0 0
    %702 = vmatprep.subr.bf16.mxu0 0
    %703 = vmatpush1.bf16.msra.mxu0 0
    %704 = vmatprep.subr.bf16.mxu0 0
    %705 = vmatpush1.bf16.msra.mxu0 0
    %706 = vmatprep.subr.bf16.mxu0 0
    %707 = vmatpush1.bf16.msra.mxu0 0
    %708 = vmatprep.subr.bf16.mxu0 0
    %709 = vmatpush1.bf16.msra.mxu0 0
    %710 = vmatprep.subr.bf16.mxu0 0
    %711 = vmatpush1.bf16.msra.mxu0 0
    %712 = vmatprep.subr.bf16.mxu0 0
    %713 = vmatpush1.bf16.msra.mxu0 0
    %714 = vmatprep.subr.bf16.mxu0 0
    %715 = vmatpush1.bf16.msra.mxu0 0
    %716 = vmatprep.mubr.bf16.mxu0 0
    %717 = vmatmul.mubr.bf16.gmra.mrb[0].mxu0 %v679
    %v718 = vpop.f32.mrb[0].mxu0
    %v719 = vadd.f32 0.0, %v718
    %v720 = vpop.f32.mrb[0].mxu0
    %v721 = vpop.f32.mrb[0].mxu0
    %v722 = vpop.f32.mrb[0].mxu0
    %723 = vdwg.mxu0
    %725 = vrot.lane.b32.xlu0 %v334, 112
    %v726 = vpop.permute.xlu0 %725
    %v728 = vsel %vm453, %v674, 0
    %v731 = vsel %vm457, %v726, 0
    %733 = vmatprep.subr.bf16.mxu0 0
    %734 = vmatpush1.bf16.msra.mxu0 %v731
    %735 = vmatprep.subr.bf16.mxu0 0
    %736 = vmatpush1.bf16.msra.mxu0 0
    %737 = vmatprep.subr.bf16.mxu0 0
    %738 = vmatpush1.bf16.msra.mxu0 0
    %739 = vmatprep.subr.bf16.mxu0 0
    %740 = vmatpush1.bf16.msra.mxu0 0
    %741 = vmatprep.subr.bf16.mxu0 0
    %742 = vmatpush1.bf16.msra.mxu0 0
    %743 = vmatprep.subr.bf16.mxu0 0
    %744 = vmatpush1.bf16.msra.mxu0 0
    %745 = vmatprep.subr.bf16.mxu0 0
    %746 = vmatpush1.bf16.msra.mxu0 0
    %747 = vmatprep.subr.bf16.mxu0 0
    %748 = vmatpush1.bf16.msra.mxu0 0
    %749 = vmatprep.subr.bf16.mxu0 0
    %750 = vmatpush1.bf16.msra.mxu0 0
    %751 = vmatprep.subr.bf16.mxu0 0
    %752 = vmatpush1.bf16.msra.mxu0 0
    %753 = vmatprep.subr.bf16.mxu0 0
    %754 = vmatpush1.bf16.msra.mxu0 0
    %755 = vmatprep.subr.bf16.mxu0 0
    %756 = vmatpush1.bf16.msra.mxu0 0
    %757 = vmatprep.subr.bf16.mxu0 0
    %758 = vmatpush1.bf16.msra.mxu0 0
    %759 = vmatprep.subr.bf16.mxu0 0
    %760 = vmatpush1.bf16.msra.mxu0 0
    %761 = vmatprep.subr.bf16.mxu0 0
    %762 = vmatpush1.bf16.msra.mxu0 0
    %763 = vmatprep.subr.bf16.mxu0 0
    %764 = vmatpush1.bf16.msra.mxu0 0
    %765 = vmatprep.mubr.bf16.mxu0 0
    %766 = vmatmul.mubr.bf16.gmra.mrb[0].mxu0 %v728
    %v767 = vpop.f32.mrb[0].mxu0
    %v768 = vadd.f32 0.0, %v767
    %v769 = vpop.f32.mrb[0].mxu0
    %v770 = vpop.f32.mrb[0].mxu0
    %v771 = vpop.f32.mrb[0].mxu0
    %772 = vdwg.mxu0
    %773 = vrot.lane.b32.xlu0 %v329, 96
    %v774 = vpop.permute.xlu0 %773
    %775 = vrot.lane.b32.xlu0 %v331, 96
    %v776 = vpop.permute.xlu0 %775
    %v778 = vsel %vm335, %v774, 0
    %v781 = vsel %vm335, %v776, 0
    %783 = vmatprep.subr.bf16.mxu0 0
    %784 = vmatpush1.bf16.xpose.msra.mxu0 %v781
    %785 = vmatprep.subr.bf16.mxu0 0
    %786 = vmatpush1.bf16.xpose.msra.mxu0 0
    %787 = vmatprep.subr.bf16.mxu0 0
    %788 = vmatpush1.bf16.xpose.msra.mxu0 0
    %789 = vmatprep.subr.bf16.mxu0 0
    %790 = vmatpush1.bf16.xpose.msra.mxu0 0
    %791 = vmatprep.subr.bf16.mxu0 0
    %792 = vmatpush1.bf16.xpose.msra.mxu0 0
    %793 = vmatprep.subr.bf16.mxu0 0
    %794 = vmatpush1.bf16.xpose.msra.mxu0 0
    %795 = vmatprep.subr.bf16.mxu0 0
    %796 = vmatpush1.bf16.xpose.msra.mxu0 0
    %797 = vmatprep.subr.bf16.mxu0 0
    %798 = vmatpush1.bf16.xpose.msra.mxu0 0
    %799 = vmatprep.subr.bf16.mxu0 0
    %800 = vmatpush1.bf16.xpose.msra.mxu0 0
    %801 = vmatprep.subr.bf16.mxu0 0
    %802 = vmatpush1.bf16.xpose.msra.mxu0 0
    %803 = vmatprep.subr.bf16.mxu0 0
    %804 = vmatpush1.bf16.xpose.msra.mxu0 0
    %805 = vmatprep.subr.bf16.mxu0 0
    %806 = vmatpush1.bf16.xpose.msra.mxu0 0
    %807 = vmatprep.subr.bf16.mxu0 0
    %808 = vmatpush1.bf16.xpose.msra.mxu0 0
    %809 = vmatprep.subr.bf16.mxu0 0
    %810 = vmatpush1.bf16.xpose.msra.mxu0 0
    %811 = vmatprep.subr.bf16.mxu0 0
    %812 = vmatpush1.bf16.xpose.msra.mxu0 0
    %813 = vmatprep.subr.bf16.mxu0 0
    %814 = vmatpush1.bf16.xpose.msra.mxu0 0
    %815 = vmatprep.mubr.bf16.mxu0 0
    %816 = vmatmul.mubr.bf16.gmra.mrb[0].mxu0 %v778
    %v817 = vpop.f32.mrb[0].mxu0
    %v818 = vadd.f32 0.0, %v817
    %v819 = vpop.f32.mrb[0].mxu0
    %v820 = vpop.f32.mrb[0].mxu0
    %v821 = vpop.f32.mrb[0].mxu0
    %822 = vdwg.mxu0
    %823 = vrot.lane.b32.xlu0 %v330, 96
    %v824 = vpop.permute.xlu0 %823
    %825 = vrot.lane.b32.xlu0 %v332, 96
    %v826 = vpop.permute.xlu0 %825
    %v828 = vsel %vm335, %v824, 0
    %v831 = vsel %vm335, %v826, 0
    %833 = vmatprep.subr.bf16.mxu0 0
    %834 = vmatpush1.bf16.xpose.msra.mxu0 %v831
    %835 = vmatprep.subr.bf16.mxu0 0
    %836 = vmatpush1.bf16.xpose.msra.mxu0 0
    %837 = vmatprep.subr.bf16.mxu0 0
    %838 = vmatpush1.bf16.xpose.msra.mxu0 0
    %839 = vmatprep.subr.bf16.mxu0 0
    %840 = vmatpush1.bf16.xpose.msra.mxu0 0
    %841 = vmatprep.subr.bf16.mxu0 0
    %842 = vmatpush1.bf16.xpose.msra.mxu0 0
    %843 = vmatprep.subr.bf16.mxu0 0
    %844 = vmatpush1.bf16.xpose.msra.mxu0 0
    %845 = vmatprep.subr.bf16.mxu0 0
    %846 = vmatpush1.bf16.xpose.msra.mxu0 0
    %847 = vmatprep.subr.bf16.mxu0 0
    %848 = vmatpush1.bf16.xpose.msra.mxu0 0
    %849 = vmatprep.subr.bf16.mxu0 0
    %850 = vmatpush1.bf16.xpose.msra.mxu0 0
    %851 = vmatprep.subr.bf16.mxu0 0
    %852 = vmatpush1.bf16.xpose.msra.mxu0 0
    %853 = vmatprep.subr.bf16.mxu0 0
    %854 = vmatpush1.bf16.xpose.msra.mxu0 0
    %855 = vmatprep.subr.bf16.mxu0 0
    %856 = vmatpush1.bf16.xpose.msra.mxu0 0
    %857 = vmatprep.subr.bf16.mxu0 0
    %858 = vmatpush1.bf16.xpose.msra.mxu0 0
    %859 = vmatprep.subr.bf16.mxu0 0
    %860 = vmatpush1.bf16.xpose.msra.mxu0 0
    %861 = vmatprep.subr.bf16.mxu0 0
    %862 = vmatpush1.bf16.xpose.msra.mxu0 0
    %863 = vmatprep.subr.bf16.mxu0 0
    %864 = vmatpush1.bf16.xpose.msra.mxu0 0
    %865 = vmatprep.mubr.bf16.mxu0 0
    %866 = vmatmul.mubr.bf16.gmra.mrb[0].mxu0 %v828
    %v867 = vpop.f32.mrb[0].mxu0
    %v868 = vadd.f32 0.0, %v867
    %v869 = vpop.f32.mrb[0].mxu0
    %v870 = vpop.f32.mrb[0].mxu0
    %v871 = vpop.f32.mrb[0].mxu0
    %872 = vdwg.mxu0
    %v873 = vsel %vm428, %v818, -inf
    %874 = vmax.xlane.f32.xlu0 %v873
    %v875 = vpop.xlane.xlu0 %874
    %v876 = vsel %vm428, %v868, -inf
    %877 = vmax.xlane.f32.xlu0 %v876
    %v878 = vpop.xlane.xlu0 %877
    %v879 = vsub.f32 %v818, %v875
    %v880 = vsub.f32 %v868, %v878
    %v881 = vmul.f32 %v879, 1.442695
    %v882 = vpow.pop %v881
    %v883 = vmul.f32 %v880, 1.442695
    %v884 = vpow.pop %v883
    %v885 = vsel %vm428, %v882, 0.0
    %886 = vadd.xlane.f32.xlu0 %v885
    %v887 = vpop.xlane.xlu0 %886
    %v888 = vsel %vm428, %v884, 0.0
    %889 = vadd.xlane.f32.xlu0 %v888
    %v890 = vpop.xlane.xlu0 %889
    %v891 = vrcp.pop %v887
    %v892 = vmul.f32 %v882, %v891
    %v893 = vrcp.pop %v890
    %v894 = vmul.f32 %v884, %v893
    %v895 = vpack.c.bf16 %v892, %v892
    %v896 = vpack.c.bf16 %v894, %v894
    %897 = vrot.lane.b32.xlu0 %v333, 96
    %v898 = vpop.permute.xlu0 %897
    %v900 = vsel %vm453, %v895, 0
    %v903 = vsel %vm457, %v898, 0
    %905 = vmatprep.subr.bf16.mxu0 0
    %906 = vmatpush1.bf16.msra.mxu0 %v903
    %907 = vmatprep.subr.bf16.mxu0 0
    %908 = vmatpush1.bf16.msra.mxu0 0
    %909 = vmatprep.subr.bf16.mxu0 0
    %910 = vmatpush1.bf16.msra.mxu0 0
    %911 = vmatprep.subr.bf16.mxu0 0
    %912 = vmatpush1.bf16.msra.mxu0 0
    %913 = vmatprep.subr.bf16.mxu0 0
    %914 = vmatpush1.bf16.msra.mxu0 0
    %915 = vmatprep.subr.bf16.mxu0 0
    %916 = vmatpush1.bf16.msra.mxu0 0
    %917 = vmatprep.subr.bf16.mxu0 0
    %918 = vmatpush1.bf16.msra.mxu0 0
    %919 = vmatprep.subr.bf16.mxu0 0
    %920 = vmatpush1.bf16.msra.mxu0 0
    %921 = vmatprep.subr.bf16.mxu0 0
    %922 = vmatpush1.bf16.msra.mxu0 0
    %923 = vmatprep.subr.bf16.mxu0 0
    %924 = vmatpush1.bf16.msra.mxu0 0
    %925 = vmatprep.subr.bf16.mxu0 0
    %926 = vmatpush1.bf16.msra.mxu0 0
    %927 = vmatprep.subr.bf16.mxu0 0
    %928 = vmatpush1.bf16.msra.mxu0 0
    %929 = vmatprep.subr.bf16.mxu0 0
    %930 = vmatpush1.bf16.msra.mxu0 0
    %931 = vmatprep.subr.bf16.mxu0 0
    %932 = vmatpush1.bf16.msra.mxu0 0
    %933 = vmatprep.subr.bf16.mxu0 0
    %934 = vmatpush1.bf16.msra.mxu0 0
    %935 = vmatprep.subr.bf16.mxu0 0
    %936 = vmatpush1.bf16.msra.mxu0 0
    %937 = vmatprep.mubr.bf16.mxu0 0
    %938 = vmatmul.mubr.bf16.gmra.mrb[0].mxu0 %v900
    %v939 = vpop.f32.mrb[0].mxu0
    %v940 = vadd.f32 0.0, %v939
    %v941 = vpop.f32.mrb[0].mxu0
    %v942 = vpop.f32.mrb[0].mxu0
    %v943 = vpop.f32.mrb[0].mxu0
    %944 = vdwg.mxu0
    %945 = vrot.lane.b32.xlu0 %v334, 96
    %v946 = vpop.permute.xlu0 %945
    %v948 = vsel %vm453, %v896, 0
    %v951 = vsel %vm457, %v946, 0
    %953 = vmatprep.subr.bf16.mxu0 0
    %954 = vmatpush1.bf16.msra.mxu0 %v951
    %955 = vmatprep.subr.bf16.mxu0 0
    %956 = vmatpush1.bf16.msra.mxu0 0
    %957 = vmatprep.subr.bf16.mxu0 0
    %958 = vmatpush1.bf16.msra.mxu0 0
    %959 = vmatprep.subr.bf16.mxu0 0
    %960 = vmatpush1.bf16.msra.mxu0 0
    %961 = vmatprep.subr.bf16.mxu0 0
    %962 = vmatpush1.bf16.msra.mxu0 0
    %963 = vmatprep.subr.bf16.mxu0 0
    %964 = vmatpush1.bf16.msra.mxu0 0
    %965 = vmatprep.subr.bf16.mxu0 0
    %966 = vmatpush1.bf16.msra.mxu0 0
    %967 = vmatprep.subr.bf16.mxu0 0
    %968 = vmatpush1.bf16.msra.mxu0 0
    %969 = vmatprep.subr.bf16.mxu0 0
    %970 = vmatpush1.bf16.msra.mxu0 0
    %971 = vmatprep.subr.bf16.mxu0 0
    %972 = vmatpush1.bf16.msra.mxu0 0
    %973 = vmatprep.subr.bf16.mxu0 0
    %974 = vmatpush1.bf16.msra.mxu0 0
    %975 = vmatprep.subr.bf16.mxu0 0
    %976 = vmatpush1.bf16.msra.mxu0 0
    %977 = vmatprep.subr.bf16.mxu0 0
    %978 = vmatpush1.bf16.msra.mxu0 0
    %979 = vmatprep.subr.bf16.mxu0 0
    %980 = vmatpush1.bf16.msra.mxu0 0
    %981 = vmatprep.subr.bf16.mxu0 0
    %982 = vmatpush1.bf16.msra.mxu0 0
    %983 = vmatprep.subr.bf16.mxu0 0
    %984 = vmatpush1.bf16.msra.mxu0 0
    %985 = vmatprep.mubr.bf16.mxu0 0
    %986 = vmatmul.mubr.bf16.gmra.mrb[0].mxu0 %v948
    %v987 = vpop.f32.mrb[0].mxu0
    %v988 = vadd.f32 0.0, %v987
    %v989 = vpop.f32.mrb[0].mxu0
    %v990 = vpop.f32.mrb[0].mxu0
    %v991 = vpop.f32.mrb[0].mxu0
    %992 = vdwg.mxu0
    %993 = vrot.lane.b32.xlu0 %v329, 80
    %v994 = vpop.permute.xlu0 %993
    %995 = vrot.lane.b32.xlu0 %v331, 80
    %v996 = vpop.permute.xlu0 %995
    %v998 = vsel %vm335, %v994, 0
    %v1001 = vsel %vm335, %v996, 0
    %1003 = vmatprep.subr.bf16.mxu0 0
    %1004 = vmatpush1.bf16.xpose.msra.mxu0 %v1001
    %1005 = vmatprep.subr.bf16.mxu0 0
    %1006 = vmatpush1.bf16.xpose.msra.mxu0 0
    %1007 = vmatprep.subr.bf16.mxu0 0
    %1008 = vmatpush1.bf16.xpose.msra.mxu0 0
    %1009 = vmatprep.subr.bf16.mxu0 0
    %1010 = vmatpush1.bf16.xpose.msra.mxu0 0
    %1011 = vmatprep.subr.bf16.mxu0 0
    %1012 = vmatpush1.bf16.xpose.msra.mxu0 0
    %1013 = vmatprep.subr.bf16.mxu0 0
    %1014 = vmatpush1.bf16.xpose.msra.mxu0 0
    %1015 = vmatprep.subr.bf16.mxu0 0
    %1016 = vmatpush1.bf16.xpose.msra.mxu0 0
    %1017 = vmatprep.subr.bf16.mxu0 0
    %1018 = vmatpush1.bf16.xpose.msra.mxu0 0
    %1019 = vmatprep.subr.bf16.mxu0 0
    %1020 = vmatpush1.bf16.xpose.msra.mxu0 0
    %1021 = vmatprep.subr.bf16.mxu0 0
    %1022 = vmatpush1.bf16.xpose.msra.mxu0 0
    %1023 = vmatprep.subr.bf16.mxu0 0
    %1024 = vmatpush1.bf16.xpose.msra.mxu0 0
    %1025 = vmatprep.subr.bf16.mxu0 0
    %1026 = vmatpush1.bf16.xpose.msra.mxu0 0
    %1027 = vmatprep.subr.bf16.mxu0 0
    %1028 = vmatpush1.bf16.xpose.msra.mxu0 0
    %1029 = vmatprep.subr.bf16.mxu0 0
    %1030 = vmatpush1.bf16.xpose.msra.mxu0 0
    %1031 = vmatprep.subr.bf16.mxu0 0
    %1032 = vmatpush1.bf16.xpose.msra.mxu0 0
    %1033 = vmatprep.subr.bf16.mxu0 0
    %1034 = vmatpush1.bf16.xpose.msra.mxu0 0
    %1035 = vmatprep.mubr.bf16.mxu0 0
    %1036 = vmatmul.mubr.bf16.gmra.mrb[0].mxu0 %v998
    %v1037 = vpop.f32.mrb[0].mxu0
    %v1038 = vadd.f32 0.0, %v1037
    %v1039 = vpop.f32.mrb[0].mxu0
    %v1040 = vpop.f32.mrb[0].mxu0
    %v1041 = vpop.f32.mrb[0].mxu0
    %1042 = vdwg.mxu0
    %1043 = vrot.lane.b32.xlu0 %v330, 80
    %v1044 = vpop.permute.xlu0 %1043
    %1045 = vrot.lane.b32.xlu0 %v332, 80
    %v1046 = vpop.permute.xlu0 %1045
    %v1048 = vsel %vm335, %v1044, 0
    %v1051 = vsel %vm335, %v1046, 0
    %1053 = vmatprep.subr.bf16.mxu0 0
    %1054 = vmatpush1.bf16.xpose.msra.mxu0 %v1051
    %1055 = vmatprep.subr.bf16.mxu0 0
    %1056 = vmatpush1.bf16.xpose.msra.mxu0 0
    %1057 = vmatprep.subr.bf16.mxu0 0
    %1058 = vmatpush1.bf16.xpose.msra.mxu0 0
    %1059 = vmatprep.subr.bf16.mxu0 0
    %1060 = vmatpush1.bf16.xpose.msra.mxu0 0
    %1061 = vmatprep.subr.bf16.mxu0 0
    %1062 = vmatpush1.bf16.xpose.msra.mxu0 0
    %1063 = vmatprep.subr.bf16.mxu0 0
    %1064 = vmatpush1.bf16.xpose.msra.mxu0 0
    %1065 = vmatprep.subr.bf16.mxu0 0
    %1066 = vmatpush1.bf16.xpose.msra.mxu0 0
    %1067 = vmatprep.subr.bf16.mxu0 0
    %1068 = vmatpush1.bf16.xpose.msra.mxu0 0
    %1069 = vmatprep.subr.bf16.mxu0 0
    %1070 = vmatpush1.bf16.xpose.msra.mxu0 0
    %1071 = vmatprep.subr.bf16.mxu0 0
    %1072 = vmatpush1.bf16.xpose.msra.mxu0 0
    %1073 = vmatprep.subr.bf16.mxu0 0
    %1074 = vmatpush1.bf16.xpose.msra.mxu0 0
    %1075 = vmatprep.subr.bf16.mxu0 0
    %1076 = vmatpush1.bf16.xpose.msra.mxu0 0
    %1077 = vmatprep.subr.bf16.mxu0 0
    %1078 = vmatpush1.bf16.xpose.msra.mxu0 0
    %1079 = vmatprep.subr.bf16.mxu0 0
    %1080 = vmatpush1.bf16.xpose.msra.mxu0 0
    %1081 = vmatprep.subr.bf16.mxu0 0
    %1082 = vmatpush1.bf16.xpose.msra.mxu0 0
    %1083 = vmatprep.subr.bf16.mxu0 0
    %1084 = vmatpush1.bf16.xpose.msra.mxu0 0
    %1085 = vmatprep.mubr.bf16.mxu0 0
    %1086 = vmatmul.mubr.bf16.gmra.mrb[0].mxu0 %v1048
    %v1087 = vpop.f32.mrb[0].mxu0
    %v1088 = vadd.f32 0.0, %v1087
    %v1089 = vpop.f32.mrb[0].mxu0
    %v1090 = vpop.f32.mrb[0].mxu0
    %v1091 = vpop.f32.mrb[0].mxu0
    %1092 = vdwg.mxu0
    %v1093 = vsel %vm428, %v1038, -inf
    %1094 = vmax.xlane.f32.xlu0 %v1093
    %v1095 = vpop.xlane.xlu0 %1094
    %v1096 = vsel %vm428, %v1088, -inf
    %1097 = vmax.xlane.f32.xlu0 %v1096
    %v1098 = vpop.xlane.xlu0 %1097
    %v1099 = vsub.f32 %v1038, %v1095
    %v1100 = vsub.f32 %v1088, %v1098
    %v1101 = vmul.f32 %v1099, 1.442695
    %v1102 = vpow.pop %v1101
    %v1103 = vmul.f32 %v1100, 1.442695
    %v1104 = vpow.pop %v1103
    %v1105 = vsel %vm428, %v1102, 0.0
    %1106 = vadd.xlane.f32.xlu0 %v1105
    %v1107 = vpop.xlane.xlu0 %1106
    %v1108 = vsel %vm428, %v1104, 0.0
    %1109 = vadd.xlane.f32.xlu0 %v1108
    %v1110 = vpop.xlane.xlu0 %1109
    %v1111 = vrcp.pop %v1107
    %v1112 = vmul.f32 %v1102, %v1111
    %v1113 = vrcp.pop %v1110
    %v1114 = vmul.f32 %v1104, %v1113
    %v1115 = vpack.c.bf16 %v1112, %v1112
    %v1116 = vpack.c.bf16 %v1114, %v1114
    %1117 = vrot.lane.b32.xlu0 %v333, 80
    %v1118 = vpop.permute.xlu0 %1117
    %v1120 = vsel %vm453, %v1115, 0
    %v1123 = vsel %vm457, %v1118, 0
    %1125 = vmatprep.subr.bf16.mxu0 0
    %1126 = vmatpush1.bf16.msra.mxu0 %v1123
    %1127 = vmatprep.subr.bf16.mxu0 0
    %1128 = vmatpush1.bf16.msra.mxu0 0
    %1129 = vmatprep.subr.bf16.mxu0 0
    %1130 = vmatpush1.bf16.msra.mxu0 0
    %1131 = vmatprep.subr.bf16.mxu0 0
    %1132 = vmatpush1.bf16.msra.mxu0 0
    %1133 = vmatprep.subr.bf16.mxu0 0
    %1134 = vmatpush1.bf16.msra.mxu0 0
    %1135 = vmatprep.subr.bf16.mxu0 0
    %1136 = vmatpush1.bf16.msra.mxu0 0
    %1137 = vmatprep.subr.bf16.mxu0 0
    %1138 = vmatpush1.bf16.msra.mxu0 0
    %1139 = vmatprep.subr.bf16.mxu0 0
    %1140 = vmatpush1.bf16.msra.mxu0 0
    %1141 = vmatprep.subr.bf16.mxu0 0
    %1142 = vmatpush1.bf16.msra.mxu0 0
    %1143 = vmatprep.subr.bf16.mxu0 0
    %1144 = vmatpush1.bf16.msra.mxu0 0
    %1145 = vmatprep.subr.bf16.mxu0 0
    %1146 = vmatpush1.bf16.msra.mxu0 0
    %1147 = vmatprep.subr.bf16.mxu0 0
    %1148 = vmatpush1.bf16.msra.mxu0 0
    %1149 = vmatprep.subr.bf16.mxu0 0
    %1150 = vmatpush1.bf16.msra.mxu0 0
    %1151 = vmatprep.subr.bf16.mxu0 0
    %1152 = vmatpush1.bf16.msra.mxu0 0
    %1153 = vmatprep.subr.bf16.mxu0 0
    %1154 = vmatpush1.bf16.msra.mxu0 0
    %1155 = vmatprep.subr.bf16.mxu0 0
    %1156 = vmatpush1.bf16.msra.mxu0 0
    %1157 = vmatprep.mubr.bf16.mxu0 0
    %1158 = vmatmul.mubr.bf16.gmra.mrb[0].mxu0 %v1120
    %v1159 = vpop.f32.mrb[0].mxu0
    %v1160 = vadd.f32 0.0, %v1159
    %v1161 = vpop.f32.mrb[0].mxu0
    %v1162 = vpop.f32.mrb[0].mxu0
    %v1163 = vpop.f32.mrb[0].mxu0
    %1164 = vdwg.mxu0
    %1165 = vrot.lane.b32.xlu0 %v334, 80
    %v1166 = vpop.permute.xlu0 %1165
    %v1168 = vsel %vm453, %v1116, 0
    %v1171 = vsel %vm457, %v1166, 0
    %1173 = vmatprep.subr.bf16.mxu0 0
    %1174 = vmatpush1.bf16.msra.mxu0 %v1171
    %1175 = vmatprep.subr.bf16.mxu0 0
    %1176 = vmatpush1.bf16.msra.mxu0 0
    %1177 = vmatprep.subr.bf16.mxu0 0
    %1178 = vmatpush1.bf16.msra.mxu0 0
    %1179 = vmatprep.subr.bf16.mxu0 0
    %1180 = vmatpush1.bf16.msra.mxu0 0
    %1181 = vmatprep.subr.bf16.mxu0 0
    %1182 = vmatpush1.bf16.msra.mxu0 0
    %1183 = vmatprep.subr.bf16.mxu0 0
    %1184 = vmatpush1.bf16.msra.mxu0 0
    %1185 = vmatprep.subr.bf16.mxu0 0
    %1186 = vmatpush1.bf16.msra.mxu0 0
    %1187 = vmatprep.subr.bf16.mxu0 0
    %1188 = vmatpush1.bf16.msra.mxu0 0
    %1189 = vmatprep.subr.bf16.mxu0 0
    %1190 = vmatpush1.bf16.msra.mxu0 0
    %1191 = vmatprep.subr.bf16.mxu0 0
    %1192 = vmatpush1.bf16.msra.mxu0 0
    %1193 = vmatprep.subr.bf16.mxu0 0
    %1194 = vmatpush1.bf16.msra.mxu0 0
    %1195 = vmatprep.subr.bf16.mxu0 0
    %1196 = vmatpush1.bf16.msra.mxu0 0
    %1197 = vmatprep.subr.bf16.mxu0 0
    %1198 = vmatpush1.bf16.msra.mxu0 0
    %1199 = vmatprep.subr.bf16.mxu0 0
    %1200 = vmatpush1.bf16.msra.mxu0 0
    %1201 = vmatprep.subr.bf16.mxu0 0
    %1202 = vmatpush1.bf16.msra.mxu0 0
    %1203 = vmatprep.subr.bf16.mxu0 0
    %1204 = vmatpush1.bf16.msra.mxu0 0
    %1205 = vmatprep.mubr.bf16.mxu0 0
    %1206 = vmatmul.mubr.bf16.gmra.mrb[0].mxu0 %v1168
    %v1207 = vpop.f32.mrb[0].mxu0
    %v1208 = vadd.f32 0.0, %v1207
    %v1209 = vpop.f32.mrb[0].mxu0
    %v1210 = vpop.f32.mrb[0].mxu0
    %v1211 = vpop.f32.mrb[0].mxu0
    %1212 = vdwg.mxu0
    %1215 = vrot.lane.b32.xlu0 %v670, 8
    %v1216 = vpop.permute.xlu0 %1215
    %1217 = vrot.lane.b32.xlu0 %v672, 8
    %v1218 = vpop.permute.xlu0 %1217
    %1223 = vrot.lane.b32.xlu0 %v892, 16
    %v1224 = vpop.permute.xlu0 %1223
    %1225 = vrot.lane.b32.xlu0 %v894, 16
    %v1226 = vpop.permute.xlu0 %1225
    %1231 = vrot.lane.b32.xlu0 %v1112, 24
    %v1232 = vpop.permute.xlu0 %1231
    %1233 = vrot.lane.b32.xlu0 %v1114, 24
    %v1234 = vpop.permute.xlu0 %1233
    %v1237 = vsel %vm453, %v448, %v1216
    %v1238 = vsel %vm453, %v450, %v1218
    %v1239 = vsel %vm335, %v1237, %v1224
    %v1240 = vsel %vm335, %v1238, %v1226
    %vm1241 = vcmask 195584
    %v1242 = vsel %vm1241, %v1239, %v1232
    %v1243 = vsel %vm1241, %v1240, %v1234
    %vm1244 = vcmask 253952
    %1245 = vst.msk [vmem:[#allocation11] sm:$0x1] %vm1244, %v1242
    %1246 = vst.msk [vmem:[#allocation11 + $0x1] sm:$0x1] %vm1244, %v1243
    %1249 = vrot.lane.b32.xlu0 %v719, 16
    %v1250 = vpop.permute.xlu0 %1249
    %1251 = vrot.lane.b32.xlu0 %v768, 16
    %v1252 = vpop.permute.xlu0 %1251
    %1257 = vrot.lane.b32.xlu0 %v940, 32
    %v1258 = vpop.permute.xlu0 %1257
    %1259 = vrot.lane.b32.xlu0 %v988, 32
    %v1260 = vpop.permute.xlu0 %1259
    %1265 = vrot.lane.b32.xlu0 %v1160, 48
    %v1266 = vpop.permute.xlu0 %1265
    %1267 = vrot.lane.b32.xlu0 %v1208, 48
    %v1268 = vpop.permute.xlu0 %1267
    %v1271 = vsel %vm335, %v496, %v1250
    %v1272 = vsel %vm335, %v542, %v1252
    %v1273 = vsel %vm126, %v1271, %v1258
    %v1274 = vsel %vm126, %v1272, %v1260
    %vm1275 = vcmask 392192
    %v1276 = vsel %vm1275, %v1273, %v1266
    %v1277 = vsel %vm1275, %v1274, %v1268
    %v1278 = vpack.c.bf16 %v1276, %v1276
    %v1279 = vpack.c.bf16 %v1277, %v1277
    %v1280 = vld [vmem:[%s6] sm:$0xf]
    %v1281 = vld [vmem:[%s6 + $0x4] sm:$0xf]
    %v1282 = vld [vmem:[%s6 + $0x8] sm:$0xf]
    %v1283 = vld [vmem:[%s6 + $0xc] sm:$0xf]
    %v1284 = vld [vmem:[%s6 + $0x10] sm:$0xf]
    %v1285 = vld [vmem:[%s6 + $0x14] sm:$0xf]
    %v1286 = vld [vmem:[%s6 + $0x18] sm:$0xf]
    %v1287 = vld [vmem:[%s6 + $0x1c] sm:$0xf]
    %v1290 = vunpack.c.l.b16 %v1278
    %v1291 = vunpack.c.l.b16 %v1279
    %v1292 = vrot.slane %v1291, 7
    %vm1293 = vcmask 1041409
    %v1294 = vsel %vm1293, %v1292, %v1290
    %v1295 = vpack.c.b16 %v1294, %v1294
    %v1304 = vunpack.c.l.b16 %v1280
    %v1305 = vunpack.c.l.b16 %v1281
    %v1306 = vunpack.c.l.b16 %v1282
    %v1307 = vunpack.c.l.b16 %v1283
    %v1308 = vunpack.c.l.b16 %v1284
    %v1309 = vunpack.c.l.b16 %v1285
    %v1310 = vunpack.c.l.b16 %v1286
    %v1311 = vunpack.c.l.b16 %v1287
    %v1312 = vpack.c.b16 %v1305, %v1304
    %v1313 = vpack.c.b16 %v1307, %v1306
    %v1314 = vpack.c.b16 %v1309, %v1308
    %v1315 = vpack.c.b16 %v1311, %v1310
    %vm1320 = vcmask 523264
    %v1322 = vsel %vm1320, %v1295, 0
    %1324 = vmatprep.subr.bf16.mxu0 0
    %1325 = vmatpush1.bf16.msra.mxu0 %v1312
    %1326 = vmatprep.subr.bf16.mxu0 0
    %1327 = vmatpush1.bf16.msra.mxu0 %v1313
    %1328 = vmatprep.subr.bf16.mxu0 0
    %1329 = vmatpush1.bf16.msra.mxu0 %v1314
    %1330 = vmatprep.subr.bf16.mxu0 0
    %1331 = vmatpush1.bf16.msra.mxu0 %v1315
    %1332 = vmatprep.subr.bf16.mxu0 0
    %1333 = vmatpush1.bf16.msra.mxu0 0
    %1334 = vmatprep.subr.bf16.mxu0 0
    %1335 = vmatpush1.bf16.msra.mxu0 0
    %1336 = vmatprep.subr.bf16.mxu0 0
    %1337 = vmatpush1.bf16.msra.mxu0 0
    %1338 = vmatprep.subr.bf16.mxu0 0
    %1339 = vmatpush1.bf16.msra.mxu0 0
    %1340 = vmatprep.subr.bf16.mxu0 0
    %1341 = vmatpush1.bf16.msra.mxu0 0
    %1342 = vmatprep.subr.bf16.mxu0 0
    %1343 = vmatpush1.bf16.msra.mxu0 0
    %1344 = vmatprep.subr.bf16.mxu0 0
    %1345 = vmatpush1.bf16.msra.mxu0 0
    %1346 = vmatprep.subr.bf16.mxu0 0
    %1347 = vmatpush1.bf16.msra.mxu0 0
    %1348 = vmatprep.subr.bf16.mxu0 0
    %1349 = vmatpush1.bf16.msra.mxu0 0
    %1350 = vmatprep.subr.bf16.mxu0 0
    %1351 = vmatpush1.bf16.msra.mxu0 0
    %1352 = vmatprep.subr.bf16.mxu0 0
    %1353 = vmatpush1.bf16.msra.mxu0 0
    %1354 = vmatprep.subr.bf16.mxu0 0
    %1355 = vmatpush1.bf16.msra.mxu0 0
    %1356 = vmatprep.mubr.bf16.mxu0 0
    %1357 = vmatmul.mubr.bf16.gmra.mrb[0].mxu0 %v1322
    %v1358 = vpop.f32.mrb[0].mxu0
    %v1359 = vadd.f32 %v108, %v1358
    %v1360 = vpop.f32.mrb[0].mxu0
    %v1361 = vpop.f32.mrb[0].mxu0
    %v1362 = vpop.f32.mrb[0].mxu0
    %1363 = vdwg.mxu0
    %v1364 = vld [vmem:[%s7] sm:$0x1]
    %v1365 = vld [vmem:[%s8] sm:$0x1]
    %vm1366 = vcmask 254976
    %v1367 = vsel %vm1366, %v1359, 0.0
    %1368 = vadd.xlane.f32.xlu0 %v1367
    %v1369 = vpop.xlane.xlu0 %1368
    %v1370 = vrcp.pop 32.0
    %v1371 = vmul.f32 %v1369, %v1370
    %v1372 = vsub.f32 %v1359, %v1371
    %v1373 = vmul.f32 %v1372, %v1372
    %v1374 = vsel %vm1366, %v1373, 0.0
    %1375 = vadd.xlane.f32.xlu0 %v1374
    %v1376 = vpop.xlane.xlu0 %1375
    %v1377 = vmul.f32 %v1376, %v1370
    %v1378 = vadd.f32 %v1377, 1e-06
    %v1379 = vrsqrt.pop %v1378
    %v1380 = vmul.f32 %v1372, %v1379
    %v1382 = vlaneseq
    %v1383 = vshrl.u32 %v1382, 7
    %v1384 = vsub.s32 0, %v1383
    %v1385 = vrot.slane %v1364, %v1384
    %v1387 = vmul.f32 %v1380, %v1385
    %v1389 = vlaneseq
    %v1390 = vshrl.u32 %v1389, 7
    %v1391 = vsub.s32 0, %v1390
    %v1392 = vrot.slane %v1365, %v1391
    %v1394 = vadd.f32 %v1387, %v1392
    %v1395 = vpack.c.bf16 %v1394, %v1394
    %v1396 = vld [vmem:[%s9] sm:$0xf]
    %v1397 = vld [vmem:[%s9 + $0x4] sm:$0xf]
    %v1398 = vld [vmem:[%s9 + $0x8] sm:$0xf]
    %v1399 = vld [vmem:[%s9 + $0xc] sm:$0xf]
    %v1400 = vld [vmem:[%s10] sm:$0x1]
    %v1402 = vlaneseq
    %v1403 = vshrl.u32 %v1402, 7
    %v1404 = vsub.s32 0, %v1403
    %v1405 = vrot.slane %v1400, %v1404
    %v1411 = vunpack.c.l.b16 %v1396
    %v1412 = vunpack.c.l.b16 %v1397
    %v1413 = vunpack.c.l.b16 %v1398
    %v1414 = vunpack.c.l.b16 %v1399
    %v1415 = vpack.c.b16 %v1412, %v1411
    %v1416 = vpack.c.b16 %v1414, %v1413
    %v1420 = vsel %vm126, %v1395, 0
    %1422 = vmatprep.subr.bf16.mxu0 0
    %1423 = vmatpush1.bf16.msra.mxu0 %v1415
    %1424 = vmatprep.subr.bf16.mxu0 0
    %1425 = vmatpush1.bf16.msra.mxu0 %v1416
    %1426 = vmatprep.subr.bf16.mxu0 0
    %1427 = vmatpush1.bf16.msra.mxu0 0
    %1428 = vmatprep.subr.bf16.mxu0 0
    %1429 = vmatpush1.bf16.msra.mxu0 0
    %1430 = vmatprep.subr.bf16.mxu0 0
    %1431 = vmatpush1.bf16.msra.mxu0 0
    %1432 = vmatprep.subr.bf16.mxu0 0
    %1433 = vmatpush1.bf16.msra.mxu0 0
    %1434 = vmatprep.subr.bf16.mxu0 0
    %1435 = vmatpush1.bf16.msra.mxu0 0
    %1436 = vmatprep.subr.bf16.mxu0 0
    %1437 = vmatpush1.bf16.msra.mxu0 0
    %1438 = vmatprep.subr.bf16.mxu0 0
    %1439 = vmatpush1.bf16.msra.mxu0 0
    %1440 = vmatprep.subr.bf16.mxu0 0
    %1441 = vmatpush1.bf16.msra.mxu0 0
    %1442 = vmatprep.subr.bf16.mxu0 0
    %1443 = vmatpush1.bf16.msra.mxu0 0
    %1444 = vmatprep.subr.bf16.mxu0 0
    %1445 = vmatpush1.bf16.msra.mxu0 0
    %1446 = vmatprep.subr.bf16.mxu0 0
    %1447 = vmatpush1.bf16.msra.mxu0 0
    %1448 = vmatprep.subr.bf16.mxu0 0
    %1449 = vmatpush1.bf16.msra.mxu0 0
    %1450 = vmatprep.subr.bf16.mxu0 0
    %1451 = vmatpush1.bf16.msra.mxu0 0
    %1452 = vmatprep.subr.bf16.mxu0 0
    %1453 = vmatpush1.bf16.msra.mxu0 0
    %1454 = vmatprep.mubr.bf16.mxu0 0
    %1455 = vmatmul.mubr.bf16.gmra.mrb[0].mxu0 %v1420
    %v1456 = vpop.f32.mrb[0].mxu0
    %v1457 = vadd.f32 %v1405, %v1456
    %v1458 = vpop.f32.mrb[0].mxu0
    %v1459 = vpop.f32.mrb[0].mxu0
    %v1460 = vpop.f32.mrb[0].mxu0
    %1461 = vdwg.mxu0
    %v1462 = vmax.f32 %v1457, 0.0
    %v1463 = vpack.c.bf16 %v1462, %v1462
    %v1464 = vld [vmem:[#allocation8] sm:$0xf]
    %v1465 = vld [vmem:[#allocation8 + $0x4] sm:$0xf]
    %v1466 = vld [vmem:[#allocation8 + $0x8] sm:$0xf]
    %v1467 = vld [vmem:[#allocation8 + $0xc] sm:$0xf]
    %v1468 = vld [vmem:[%s12] sm:$0x1]
    %v1470 = vlaneseq
    %v1471 = vshrl.u32 %v1470, 7
    %v1472 = vsub.s32 0, %v1471
    %v1473 = vrot.slane %v1468, %v1472
    %v1479 = vunpack.c.l.b16 %v1464
    %v1480 = vunpack.c.l.b16 %v1465
    %v1481 = vunpack.c.l.b16 %v1466
    %v1482 = vunpack.c.l.b16 %v1467
    %v1483 = vpack.c.b16 %v1480, %v1479
    %v1484 = vpack.c.b16 %v1482, %v1481
    %v1488 = vsel %vm126, %v1463, 0
    %1490 = vmatprep.subr.bf16.mxu0 0
    %1491 = vmatpush1.bf16.msra.mxu0 %v1483
    %1492 = vmatprep.subr.bf16.mxu0 0
    %1493 = vmatpush1.bf16.msra.mxu0 %v1484
    %1494 = vmatprep.subr.bf16.mxu0 0
    %1495 = vmatpush1.bf16.msra.mxu0 0
    %1496 = vmatprep.subr.bf16.mxu0 0
    %1497 = vmatpush1.bf16.msra.mxu0 0
    %1498 = vmatprep.subr.bf16.mxu0 0
    %1499 = vmatpush1.bf16.msra.mxu0 0
    %1500 = vmatprep.subr.bf16.mxu0 0
    %1501 = vmatpush1.bf16.msra.mxu0 0
    %1502 = vmatprep.subr.bf16.mxu0 0
    %1503 = vmatpush1.bf16.msra.mxu0 0
    %1504 = vmatprep.subr.bf16.mxu0 0
    %1505 = vmatpush1.bf16.msra.mxu0 0
    %1506 = vmatprep.subr.bf16.mxu0 0
    %1507 = vmatpush1.bf16.msra.mxu0 0
    %1508 = vmatprep.subr.bf16.mxu0 0
    %1509 = vmatpush1.bf16.msra.mxu0 0
    %1510 = vmatprep.subr.bf16.mxu0 0
    %1511 = vmatpush1.bf16.msra.mxu0 0
    %1512 = vmatprep.subr.bf16.mxu0 0
    %1513 = vmatpush1.bf16.msra.mxu0 0
    %1514 = vmatprep.subr.bf16.mxu0 0
    %1515 = vmatpush1.bf16.msra.mxu0 0
    %1516 = vmatprep.subr.bf16.mxu0 0
    %1517 = vmatpush1.bf16.msra.mxu0 0
    %1518 = vmatprep.subr.bf16.mxu0 0
    %1519 = vmatpush1.bf16.msra.mxu0 0
    %1520 = vmatprep.subr.bf16.mxu0 0
    %1521 = vmatpush1.bf16.msra.mxu0 0
    %1522 = vmatprep.mubr.bf16.mxu0 0
    %1523 = vmatmul.mubr.bf16.gmra.mrb[0].mxu0 %v1488
    %v1524 = vpop.f32.mrb[0].mxu0
    %v1525 = vadd.f32 %v1473, %v1524
    %v1526 = vpop.f32.mrb[0].mxu0
    %v1527 = vpop.f32.mrb[0].mxu0
    %v1528 = vpop.f32.mrb[0].mxu0
    %1529 = vdwg.mxu0
    %v1530 = vadd.f32 %v1525, %v1394
    %v1531 = vld [vmem:[%s13] sm:$0x1]
    %v1532 = vld [vmem:[%s14] sm:$0x1]
    %v1533 = vsel %vm1366, %v1530, 0.0
    %1534 = vadd.xlane.f32.xlu0 %v1533
    %v1535 = vpop.xlane.xlu0 %1534
    %v1536 = vmul.f32 %v1535, %v1370
    %v1537 = vsub.f32 %v1530, %v1536
    %v1538 = vmul.f32 %v1537, %v1537
    %v1539 = vsel %vm1366, %v1538, 0.0
    %1540 = vadd.xlane.f32.xlu0 %v1539
    %v1541 = vpop.xlane.xlu0 %1540
    %v1542 = vmul.f32 %v1541, %v1370
    %v1543 = vadd.f32 %v1542, 1e-06
    %v1544 = vrsqrt.pop %v1543
    %v1545 = vmul.f32 %v1537, %v1544
    %v1547 = vlaneseq
    %v1548 = vshrl.u32 %v1547, 7
    %v1549 = vsub.s32 0, %v1548
    %v1550 = vrot.slane %v1531, %v1549
    %v1552 = vmul.f32 %v1545, %v1550
    %v1554 = vlaneseq
    %v1555 = vshrl.u32 %v1554, 7
    %v1556 = vsub.s32 0, %v1555
    %v1557 = vrot.slane %v1532, %v1556
    %v1559 = vadd.f32 %v1552, %v1557
    %1560 = vst.msk [vmem:[#allocation10] sm:$0x3] %vm1366, %v1559
    // Predicated region
    $region78: #{tpu_custom_call.1} parent=1 // pred_check
      _
    $region79: #{tpu_custom_call.1} parent=1 // pred_check_branch
      %1562 = sbr.rel (0) target = $region81
    $region80: #{tpu_custom_call.1} parent=1 // pred_region
      %s1564 = ssub.s32 32, 32
      %1565 = vsyncadd [#allocation4], %s1564
      %s1567 = sshll.u32 [#allocation10], 4
      %s1568 = int_to_ptr.vmem [resolvable:$true] %s1567
      %1570 = dma.vmem_to_hbm [thread:$0]  %s1568, 32, %s15, [#allocation4]
    $region81: #{tpu_custom_call.1} parent=1 // pred_fallthru
      _
    // Predicated region
    $region82: #{tpu_custom_call.1} parent=1 // pred_check
      _
    $region83: #{tpu_custom_call.1} parent=1 // pred_check_branch
      %1572 = sbr.rel (0) target = $region85
    $region84: #{tpu_custom_call.1} parent=1 // pred_region
      %s1574 = ssub.s32 32, 32
      %1575 = vsyncadd [#allocation12], %s1574
      %s1576 = sshll.u32 [#allocation11], 4
      %s1577 = int_to_ptr.vmem [resolvable:$true] %s1576
      %1582 = dma.vmem_to_hbm [thread:$0]  %s1577, 32, %s16, [#allocation12], 16, 16, 1
    $region85: #{tpu_custom_call.1} parent=1 // pred_fallthru
      _
    // Predicated region
    $region86: #{tpu_custom_call.1} parent=1 // pred_check
      _
    $region87: #{tpu_custom_call.1} parent=1 // pred_check_branch
      %1584 = sbr.rel (0) target = $region89
    $region88: #{tpu_custom_call.1} parent=1 // pred_region
      %1585 = dma.done [#allocation4], 32
    $region89: #{tpu_custom_call.1} parent=1 // pred_fallthru
      _
    // Predicated region
    $region90: #{tpu_custom_call.1} parent=1 // pred_check
      _
    $region91: #{tpu_custom_call.1} parent=1 // pred_check_branch
      %1587 = sbr.rel (0) target = $region93
    $region92: #{tpu_custom_call.1} parent=1 // pred_region
      %1588 = dma.done [#allocation12], 32
    $region93: #{tpu_custom_call.1} parent=1 // pred_fallthru
      _
    %1589 = vsyncpa [#allocation3], 1
    %1590 = vsyncpa [#allocation6], 1
    %1591 = vsyncpa [#allocation9], 1
    %1592 = vsyncpa [#allocation4], 1
    %1593 = vsyncpa [#allocation12], 1

</llo_original>
